<compile_context>
chip_gen: v6e
topology: v6e:2x2x1
jax: 0.10.0
libtpu: 0.0.40
codegen_flags: <defaults>
</compile_context>

<pallas_src>
import functools

import jax
import jax.numpy as jnp
import numpy as np
from jax.experimental import pallas as pl
from jax.experimental.pallas import tpu as pltpu

LEAKY_SLOPE = 0.02      # nn.LeakyReLU(0.02)
LN_EPS = 1e-12          # nn.LayerNorm(hidden, eps=1e-12)
L2_EPS = 1e-12          # F.normalize eps
HEATMAP_TEMP = 0.1      # action_head_config.heatmap_temp


def _leaky_relu(x):
    return jnp.where(x >= 0.0, x, LEAKY_SLOPE * x)


def _action_head_kernel(pc_fts_ref, tok_ref, poses_ref, aux_ref, w_ref, v_ref,
                        actions_ref, heatmap_ref, offset_ref, *, inv_temp):
    H = tok_ref.shape[-1]

    # Static views into the packed parameter slabs (zero-cost).
    w_ms1 = w_ref[0:2 * H, :]           # multiscale_fusion Linear(2H, H)
    w_ms2 = w_ref[2 * H:3 * H, :]       # multiscale_fusion Linear(H, H)
    w_dec1 = w_ref[3 * H:4 * H, :]      # decoder Linear(H, H)
    w_dec2 = w_ref[4 * H:5 * H, :]      # decoder Linear(H, 8), lane-padded to H
    b_ms1 = v_ref[0:1, :]
    ln_gamma = v_ref[1:2, :]
    ln_beta = v_ref[2:3, :]
    b_ms2 = v_ref[3:4, :]
    b_dec1 = v_ref[4:5, :]
    b_dec2 = v_ref[5:6, :]              # lane-padded to H

    # ---- multiscale_fusion: Linear -> LeakyReLU -> LayerNorm -> Linear -------------
    x = pc_fts_ref[...]                                                  # (N, 2H)
    h = jnp.dot(x, w_ms1, preferred_element_type=jnp.float32) + b_ms1
    h = _leaky_relu(h)
    mu = jnp.mean(h, axis=-1, keepdims=True)
    hc = h - mu
    var = jnp.mean(hc * hc, axis=-1, keepdims=True)
    h = hc * jax.lax.rsqrt(var + LN_EPS) * ln_gamma + ln_beta
    pc = jnp.dot(h, w_ms2, preferred_element_type=jnp.float32) + b_ms2   # (N, H)

    # ---- heatmap attention over points (heatmap_norm=True) -------------------------
    tok = tok_ref[...]                                                   # (1, H)
    pc_n = pc * jax.lax.rsqrt(
        jnp.maximum(jnp.sum(pc * pc, axis=-1, keepdims=True), L2_EPS * L2_EPS))
    tok_n = tok * jax.lax.rsqrt(
        jnp.maximum(jnp.sum(tok * tok, axis=-1, keepdims=True), L2_EPS * L2_EPS))
    # bmm(pc_norm, tok_norm^T) with a single query -> VPU mul + lane reduce (no MXU).
    logits = jnp.sum(pc_n * tok_n, axis=-1, keepdims=True)               # (N, 1)

    # TODO(synk): pc_gumbel_softmax=True path (stochastic straight-through Gumbel) is
    # not implemented; deterministic softmax branch only.
    z = logits * inv_temp
    z = z - jnp.max(z, axis=0, keepdims=True)
    e = jnp.exp(z)
    heat = e / jnp.sum(e, axis=0, keepdims=True)                         # (N, 1)
    heatmap_ref[...] = heat

    # xt = sum_n heat_n * pc_pose_n  (VPU broadcast-MAC + sublane reduce, no MXU)
    xt_hm = jnp.sum(poses_ref[...] * heat, axis=0, keepdims=True)        # (1, 3)

    # ---- decoder on cur_act_token (cat_pc_fts=False; Dropout(0) is identity) -------
    d = _leaky_relu(jnp.dot(tok, w_dec1, preferred_element_type=jnp.float32) + b_dec1)
    xg = jnp.dot(d, w_dec2, preferred_element_type=jnp.float32) + b_dec2  # (1, H) padded

    quat = xg[:, 0:4]
    quat = quat * jax.lax.rsqrt(jnp.sum(quat * quat, axis=-1, keepdims=True))
    xo = xg[:, 4:5]
    xt_off = xg[:, 5:8]

    center = aux_ref[:, 0:3]                                             # (1, 3)
    radius = aux_ref[:, 3:4]                                             # (1, 1)
    xt = (xt_hm + xt_off) * radius + center

    actions_ref[...] = jnp.concatenate([xt, quat, xo], axis=-1)          # (1, 8)
    offset_ref[...] = xt_off * radius                                    # (1, 3)


def pack_params(params, H):
    """Pack all weights / vectors into two VMEM-friendly slabs (2 DMAs total)."""
    w_dec2_pad = jnp.pad(params["dec_w2"],
                         ((0, 0), (0, H - params["dec_w2"].shape[1])))
    packed_w = jnp.concatenate(
        [params["ms_w1"], params["ms_w2"], params["dec_w1"], w_dec2_pad], axis=0)
    b_dec2_pad = jnp.pad(params["dec_b2"], (0, H - params["dec_b2"].shape[0]))
    zeros = jnp.zeros((H,), jnp.float32)
    vecs = jnp.stack([params["ms_b1"], params["ln_gamma"], params["ln_beta"],
                      params["ms_b2"], params["dec_b1"], b_dec2_pad, zeros, zeros],
                     axis=0)
    return packed_w, vecs                                                # (5H,H), (8,H)


def action_head(pc_fts, cur_act_token, pc_poses, pc_centers, pc_radii, params,
                heatmap_temp=HEATMAP_TEMP):
    B, N, in_dim = pc_fts.shape
    H = cur_act_token.shape[-1]
    assert in_dim == 2 * H, "configured for len(multiscale_pc_layers) == 2"

    packed_w, vecs = pack_params(params, H)
    aux = jnp.concatenate([pc_centers, pc_radii[:, None]], axis=-1).reshape(B, 1, 4)
    tok3 = cur_act_token.reshape(B, 1, H)

    kernel = functools.partial(_action_head_kernel, inv_temp=1.0 / heatmap_temp)

    actions3, heat3, off3 = pl.pallas_call(
        kernel,
        out_shape=(
            jax.ShapeDtypeStruct((B, 1, 8), jnp.float32),   # actions
            jax.ShapeDtypeStruct((B, N, 1), jnp.float32),   # xt_heatmap
            jax.ShapeDtypeStruct((B, 1, 3), jnp.float32),   # xt_offset * radius
        ),
        grid=(B,),
        in_specs=[
            pl.BlockSpec((None, N, in_dim), lambda b: (b, 0, 0)),   # pc_fts
            pl.BlockSpec((None, 1, H), lambda b: (b, 0, 0)),        # cur_act_token
            pl.BlockSpec((None, N, 3), lambda b: (b, 0, 0)),        # pc_poses
            pl.BlockSpec((None, 1, 4), lambda b: (b, 0, 0)),        # [center, radius]
            pl.BlockSpec((5 * H, H), lambda b: (0, 0)),             # packed weights
            pl.BlockSpec((8, H), lambda b: (0, 0)),                 # packed vectors
        ],
        out_specs=(
            pl.BlockSpec((None, 1, 8), lambda b: (b, 0, 0)),
            pl.BlockSpec((None, N, 1), lambda b: (b, 0, 0)),
            pl.BlockSpec((None, 1, 3), lambda b: (b, 0, 0)),
        ),
        compiler_params=pltpu.CompilerParams(
            dimension_semantics=("parallel",)),
    )(pc_fts, tok3, pc_poses, aux, packed_w, vecs)

    return {
        "actions": actions3.reshape(B, 8),
        "xt_heatmap": heat3.reshape(B, N),
        "xt_offset": off3.reshape(B, 3),
    }


def action_head_ref(pc_fts, tok, poses, centers, radii, params,
                    heatmap_temp=HEATMAP_TEMP):
    """Pure-JAX reference matching the PyTorch forward (eval mode)."""
    hp = jax.lax.Precision.HIGHEST
    h = jnp.einsum("bni,ih->bnh", pc_fts, params["ms_w1"], precision=hp) + params["ms_b1"]
    h = jnp.where(h >= 0, h, LEAKY_SLOPE * h)
    mu = h.mean(-1, keepdims=True)
    hc = h - mu
    var = (hc * hc).mean(-1, keepdims=True)
    h = hc / jnp.sqrt(var + LN_EPS) * params["ln_gamma"] + params["ln_beta"]
    pc = jnp.einsum("bnh,hk->bnk", h, params["ms_w2"], precision=hp) + params["ms_b2"]

    pc_n = pc / jnp.maximum(jnp.sqrt((pc * pc).sum(-1, keepdims=True)), L2_EPS)
    tok_n = tok / jnp.maximum(jnp.sqrt((tok * tok).sum(-1, keepdims=True)), L2_EPS)
    logits = jnp.einsum("bnh,bh->bn", pc_n, tok_n, precision=hp)
    heat = jax.nn.softmax(logits / heatmap_temp, axis=1)
    xt_hm = jnp.einsum("bn,bnc->bc", heat, poses, precision=hp)

    d = jnp.dot(tok, params["dec_w1"], precision=hp) + params["dec_b1"]
    d = jnp.where(d >= 0, d, LEAKY_SLOPE * d)
    xg = jnp.dot(d, params["dec_w2"], precision=hp) + params["dec_b2"]

    xr = xg[:, :4] / jnp.sqrt((xg[:, :4] ** 2).sum(-1, keepdims=True))
    xo = xg[:, 4:5]
    xt_off = xg[:, 5:]
    xt = (xt_hm + xt_off) * radii[:, None] + centers
    return {
        "actions": jnp.concatenate([xt, xr, xo], axis=-1),
        "xt_heatmap": heat,
        "xt_offset": xt_off * radii[:, None],
    }


def init_params(key, H):
    ks = jax.random.split(key, 8)
    s = 0.02
    return {
        # torch nn.Linear weights are (out, in); stored transposed (in, out) here.
        "ms_w1": jax.random.normal(ks[0], (2 * H, H), jnp.float32) * s,
        "ms_b1": jax.random.normal(ks[1], (H,), jnp.float32) * s,
        "ln_gamma": jnp.ones((H,), jnp.float32),
        "ln_beta": jnp.zeros((H,), jnp.float32),
        "ms_w2": jax.random.normal(ks[2], (H, H), jnp.float32) * s,
        "ms_b2": jax.random.normal(ks[3], (H,), jnp.float32) * s,
        "dec_w1": jax.random.normal(ks[4], (H, H), jnp.float32) * s,
        "dec_b1": jax.random.normal(ks[5], (H,), jnp.float32) * s,
        "dec_w2": jax.random.normal(ks[6], (H, 8), jnp.float32) * s,
        "dec_b2": jax.random.normal(ks[7], (8,), jnp.float32) * s,
    }


if __name__ == "__main__":
    B, N, H = 2, 128, 128          # batch, npoints, hidden_size (2 multiscale layers)
    key = jax.random.PRNGKey(0)
    kp, k1, k2, k3, k4, k5 = jax.random.split(key, 6)

    params = init_params(kp, H)
    pc_fts = jax.random.normal(k1, (B, N, 2 * H), jnp.float32)
    cur_act_token = jax.random.normal(k2, (B, H), jnp.float32)
    pc_poses = jax.random.normal(k3, (B, N, 3), jnp.float32)
    pc_centers = jax.random.normal(k4, (B, 3), jnp.float32)
    pc_radii = jax.random.uniform(k5, (B,), jnp.float32, 0.5, 1.5)

    outs = jax.jit(lambda *a: action_head(*a, params))(
        pc_fts, cur_act_token, pc_poses, pc_centers, pc_radii)
    jax.block_until_ready(outs)

    ref = action_head_ref(pc_fts, cur_act_token, pc_poses, pc_centers, pc_radii, params)
    for name in ("actions", "xt_heatmap", "xt_offset"):
        np.testing.assert_allclose(np.asarray(outs[name]), np.asarray(ref[name]),
                                   rtol=1e-2, atol=1e-3)

    assert outs["actions"].shape == (B, 8)
    assert outs["xt_heatmap"].shape == (B, N)
    assert outs["xt_offset"].shape == (B, 3)
    print("KERNEL_OK")
</pallas_src>

<mosaic_0001>
module attributes {stable_mosaic.version = 11 : i64} {
  func.func @_action_head_kernel(%arg0: i32, %arg1: memref<1x128x256xf32, #tpu.memory_space<vmem>>, %arg2: memref<1x1x128xf32, #tpu.memory_space<vmem>>, %arg3: memref<1x128x3xf32, #tpu.memory_space<vmem>>, %arg4: memref<1x1x4xf32, #tpu.memory_space<vmem>>, %arg5: memref<640x128xf32, #tpu.memory_space<vmem>>, %arg6: memref<8x128xf32, #tpu.memory_space<vmem>>, %arg7: memref<1x1x8xf32, #tpu.memory_space<vmem>>, %arg8: memref<1x128x1xf32, #tpu.memory_space<vmem>>, %arg9: memref<1x1x3xf32, #tpu.memory_space<vmem>>) attributes {dimension_semantics = [#tpu.dimension_semantics<parallel>], iteration_bounds = array<i64: 2>, scalar_prefetch = 0 : i64, scratch_operands = 0 : i64, tpu.core_type = #tpu.core_type<tc>, window_params = [{transform_indices = @transform_0, window_bounds = array<i64: 1, 128, 256>}, {transform_indices = @transform_1, window_bounds = array<i64: 1, 1, 128>}, {transform_indices = @transform_2, window_bounds = array<i64: 1, 128, 3>}, {transform_indices = @transform_3, window_bounds = array<i64: 1, 1, 4>}, {pipeline_mode = #tpu.pipeline_mode<synchronous>, transform_indices = @transform_4, window_bounds = array<i64: 640, 128>}, {pipeline_mode = #tpu.pipeline_mode<synchronous>, transform_indices = @transform_5, window_bounds = array<i64: 8, 128>}, {transform_indices = @transform_6, window_bounds = array<i64: 1, 1, 8>}, {transform_indices = @transform_7, window_bounds = array<i64: 1, 128, 1>}, {transform_indices = @transform_8, window_bounds = array<i64: 1, 1, 3>}]} {
    %c0 = arith.constant 0 : index
    %c0_0 = arith.constant 0 : index
    %0 = vector.load %arg5[%c0, %c0_0] : memref<640x128xf32, #tpu.memory_space<vmem>>, vector<256x128xf32>
    %c256 = arith.constant 256 : index
    %c0_1 = arith.constant 0 : index
    %1 = vector.load %arg5[%c256, %c0_1] : memref<640x128xf32, #tpu.memory_space<vmem>>, vector<128x128xf32>
    %c384 = arith.constant 384 : index
    %c0_2 = arith.constant 0 : index
    %2 = vector.load %arg5[%c384, %c0_2] : memref<640x128xf32, #tpu.memory_space<vmem>>, vector<128x128xf32>
    %c512 = arith.constant 512 : index
    %c0_3 = arith.constant 0 : index
    %3 = vector.load %arg5[%c512, %c0_3] : memref<640x128xf32, #tpu.memory_space<vmem>>, vector<128x128xf32>
    %c0_4 = arith.constant 0 : index
    %c0_5 = arith.constant 0 : index
    %4 = vector.load %arg6[%c0_4, %c0_5] : memref<8x128xf32, #tpu.memory_space<vmem>>, vector<1x128xf32>
    %c1 = arith.constant 1 : index
    %c0_6 = arith.constant 0 : index
    %5 = vector.load %arg6[%c1, %c0_6] : memref<8x128xf32, #tpu.memory_space<vmem>>, vector<1x128xf32>
    %c2 = arith.constant 2 : index
    %c0_7 = arith.constant 0 : index
    %6 = vector.load %arg6[%c2, %c0_7] : memref<8x128xf32, #tpu.memory_space<vmem>>, vector<1x128xf32>
    %c3 = arith.constant 3 : index
    %c0_8 = arith.constant 0 : index
    %7 = vector.load %arg6[%c3, %c0_8] : memref<8x128xf32, #tpu.memory_space<vmem>>, vector<1x128xf32>
    %c4 = arith.constant 4 : index
    %c0_9 = arith.constant 0 : index
    %8 = vector.load %arg6[%c4, %c0_9] : memref<8x128xf32, #tpu.memory_space<vmem>>, vector<1x128xf32>
    %c5 = arith.constant 5 : index
    %c0_10 = arith.constant 0 : index
    %9 = vector.load %arg6[%c5, %c0_10] : memref<8x128xf32, #tpu.memory_space<vmem>>, vector<1x128xf32>
    %c0_11 = arith.constant 0 : index
    %c0_12 = arith.constant 0 : index
    %c0_13 = arith.constant 0 : index
    %10 = vector.load %arg1[%c0_11, %c0_12, %c0_13] : memref<1x128x256xf32, #tpu.memory_space<vmem>>, vector<1x128x256xf32>
    %11 = vector.shape_cast %10 : vector<1x128x256xf32> to vector<128x256xf32>
    %cst = arith.constant dense<0.000000e+00> : vector<128x128xf32>
    %12 = tpu.matmul %11, %0, %cst {dimension_numbers = #tpu.dot_dimension_numbers<[1], [0], [0], [1], [0, 0, 1, 1], [], []>} : vector<128x256xf32>, vector<256x128xf32>, vector<128x128xf32> -> vector<128x128xf32>
    %13 = vector.broadcast %4 : vector<1x128xf32> to vector<128x128xf32>
    %14 = arith.addf %12, %13 : vector<128x128xf32>
    %cst_14 = arith.constant 0.000000e+00 : f32
    %15 = vector.broadcast %cst_14 : f32 to vector<128x128xf32>
    %16 = arith.cmpf oge, %14, %15 : vector<128x128xf32>
    %cst_15 = arith.constant 2.000000e-02 : f32
    %17 = vector.broadcast %cst_15 : f32 to vector<128x128xf32>
    %18 = arith.mulf %17, %14 : vector<128x128xf32>
    %19 = arith.select %16, %14, %18 : vector<128x128xi1>, vector<128x128xf32>
    %cst_16 = arith.constant dense<0.000000e+00> : vector<128xf32>
    %20 = vector.multi_reduction <add>, %19, %cst_16 [1] : vector<128x128xf32> to vector<128xf32>
    %21 = vector.shape_cast %20 : vector<128xf32> to vector<128x1xf32>
    %cst_17 = arith.constant 1.280000e+02 : f32
    %22 = vector.broadcast %cst_17 : f32 to vector<128x1xf32>
    %23 = arith.divf %21, %22 : vector<128x1xf32>
    %24 = vector.broadcast %23 : vector<128x1xf32> to vector<128x128xf32>
    %25 = arith.subf %19, %24 : vector<128x128xf32>
    %26 = arith.mulf %25, %25 : vector<128x128xf32>
    %cst_18 = arith.constant dense<0.000000e+00> : vector<128xf32>
    %27 = vector.multi_reduction <add>, %26, %cst_18 [1] : vector<128x128xf32> to vector<128xf32>
    %28 = vector.shape_cast %27 : vector<128xf32> to vector<128x1xf32>
    %cst_19 = arith.constant 1.280000e+02 : f32
    %29 = vector.broadcast %cst_19 : f32 to vector<128x1xf32>
    %30 = arith.divf %28, %29 : vector<128x1xf32>
    %cst_20 = arith.constant 9.99999996E-13 : f32
    %31 = vector.broadcast %cst_20 : f32 to vector<128x1xf32>
    %32 = arith.addf %30, %31 : vector<128x1xf32>
    %33 = math.rsqrt %32 : vector<128x1xf32>
    %34 = vector.broadcast %33 : vector<128x1xf32> to vector<128x128xf32>
    %35 = arith.mulf %25, %34 : vector<128x128xf32>
    %36 = vector.broadcast %5 : vector<1x128xf32> to vector<128x128xf32>
    %37 = arith.mulf %35, %36 : vector<128x128xf32>
    %38 = vector.broadcast %6 : vector<1x128xf32> to vector<128x128xf32>
    %39 = arith.addf %37, %38 : vector<128x128xf32>
    %cst_21 = arith.constant dense<0.000000e+00> : vector<128x128xf32>
    %40 = tpu.matmul %39, %1, %cst_21 {dimension_numbers = #tpu.dot_dimension_numbers<[1], [0], [0], [1], [0, 0, 1, 1], [], []>} : vector<128x128xf32>, vector<128x128xf32>, vector<128x128xf32> -> vector<128x128xf32>
    %41 = vector.broadcast %7 : vector<1x128xf32> to vector<128x128xf32>
    %42 = arith.addf %40, %41 : vector<128x128xf32>
    %c0_22 = arith.constant 0 : index
    %c0_23 = arith.constant 0 : index
    %c0_24 = arith.constant 0 : index
    %43 = vector.load %arg2[%c0_22, %c0_23, %c0_24] : memref<1x1x128xf32, #tpu.memory_space<vmem>>, vector<1x1x128xf32>
    %44 = vector.shape_cast %43 : vector<1x1x128xf32> to vector<1x128xf32>
    %45 = arith.mulf %42, %42 : vector<128x128xf32>
    %cst_25 = arith.constant dense<0.000000e+00> : vector<128xf32>
    %46 = vector.multi_reduction <add>, %45, %cst_25 [1] : vector<128x128xf32> to vector<128xf32>
    %47 = vector.shape_cast %46 : vector<128xf32> to vector<128x1xf32>
    %cst_26 = arith.constant 1.000000e-24 : f32
    %48 = vector.broadcast %cst_26 : f32 to vector<128x1xf32>
    %49 = arith.maximumf %47, %48 : vector<128x1xf32>
    %50 = math.rsqrt %49 : vector<128x1xf32>
    %51 = vector.broadcast %50 : vector<128x1xf32> to vector<128x128xf32>
    %52 = arith.mulf %42, %51 : vector<128x128xf32>
    %53 = arith.mulf %44, %44 : vector<1x128xf32>
    %cst_27 = arith.constant dense<0.000000e+00> : vector<1xf32>
    %54 = vector.multi_reduction <add>, %53, %cst_27 [1] : vector<1x128xf32> to vector<1xf32>
    %55 = vector.shape_cast %54 : vector<1xf32> to vector<1x1xf32>
    %cst_28 = arith.constant 1.000000e-24 : f32
    %56 = vector.broadcast %cst_28 : f32 to vector<1x1xf32>
    %57 = arith.maximumf %55, %56 : vector<1x1xf32>
    %58 = math.rsqrt %57 : vector<1x1xf32>
    %59 = vector.broadcast %58 : vector<1x1xf32> to vector<1x128xf32>
    %60 = arith.mulf %44, %59 : vector<1x128xf32>
    %61 = vector.broadcast %60 : vector<1x128xf32> to vector<128x128xf32>
    %62 = arith.mulf %52, %61 : vector<128x128xf32>
    %cst_29 = arith.constant dense<0.000000e+00> : vector<128xf32>
    %63 = vector.multi_reduction <add>, %62, %cst_29 [1] : vector<128x128xf32> to vector<128xf32>
    %64 = vector.shape_cast %63 : vector<128xf32> to vector<128x1xf32>
    %cst_30 = arith.constant 1.000000e+01 : f32
    %65 = vector.broadcast %cst_30 : f32 to vector<128x1xf32>
    %66 = arith.mulf %64, %65 : vector<128x1xf32>
    %cst_31 = arith.constant dense<0xFF800000> : vector<1xf32>
    %67 = vector.multi_reduction <maximumf>, %66, %cst_31 [0] : vector<128x1xf32> to vector<1xf32>
    %68 = vector.shape_cast %67 : vector<1xf32> to vector<1x1xf32>
    %69 = vector.broadcast %68 : vector<1x1xf32> to vector<128x1xf32>
    %70 = arith.subf %66, %69 : vector<128x1xf32>
    %71 = math.exp %70 : vector<128x1xf32>
    %cst_32 = arith.constant dense<0.000000e+00> : vector<1xf32>
    %72 = vector.multi_reduction <add>, %71, %cst_32 [0] : vector<128x1xf32> to vector<1xf32>
    %73 = vector.shape_cast %72 : vector<1xf32> to vector<1x1xf32>
    %74 = vector.broadcast %73 : vector<1x1xf32> to vector<128x1xf32>
    %75 = arith.divf %71, %74 : vector<128x1xf32>
    %c0_33 = arith.constant 0 : index
    %c0_34 = arith.constant 0 : index
    %c0_35 = arith.constant 0 : index
    %76 = vector.load %arg8[%c0_33, %c0_34, %c0_35] : memref<1x128x1xf32, #tpu.memory_space<vmem>>, vector<1x128x1xf32>
    %77 = vector.shape_cast %76 : vector<1x128x1xf32> to vector<128x1xf32>
    %78 = vector.shape_cast %75 : vector<128x1xf32> to vector<1x128x1xf32>
    tpu.vector_store %arg8[%c0_33, %c0_34, %c0_35], %78 {strides = array<i32>} : memref<1x128x1xf32, #tpu.memory_space<vmem>>, vector<1x128x1xf32>,
    %c0_36 = arith.constant 0 : index
    %c0_37 = arith.constant 0 : index
    %c0_38 = arith.constant 0 : index
    %79 = vector.load %arg3[%c0_36, %c0_37, %c0_38] : memref<1x128x3xf32, #tpu.memory_space<vmem>>, vector<1x128x3xf32>
    %80 = vector.shape_cast %79 : vector<1x128x3xf32> to vector<128x3xf32>
    %81 = vector.broadcast %75 : vector<128x1xf32> to vector<128x3xf32>
    %82 = arith.mulf %80, %81 : vector<128x3xf32>
    %cst_39 = arith.constant dense<0.000000e+00> : vector<3xf32>
    %83 = vector.multi_reduction <add>, %82, %cst_39 [0] : vector<128x3xf32> to vector<3xf32>
    %84 = vector.shape_cast %83 : vector<3xf32> to vector<1x3xf32>
    %cst_40 = arith.constant dense<0.000000e+00> : vector<1x128xf32>
    %85 = tpu.matmul %44, %2, %cst_40 {dimension_numbers = #tpu.dot_dimension_numbers<[1], [0], [0], [1], [0, 0, 1, 1], [], []>} : vector<1x128xf32>, vector<128x128xf32>, vector<1x128xf32> -> vector<1x128xf32>
    %86 = arith.addf %85, %8 : vector<1x128xf32>
    %cst_41 = arith.constant 0.000000e+00 : f32
    %87 = vector.broadcast %cst_41 : f32 to vector<1x128xf32>
    %88 = arith.cmpf oge, %86, %87 : vector<1x128xf32>
    %cst_42 = arith.constant 2.000000e-02 : f32
    %89 = vector.broadcast %cst_42 : f32 to vector<1x128xf32>
    %90 = arith.mulf %89, %86 : vector<1x128xf32>
    %91 = arith.select %88, %86, %90 : vector<1x128xi1>, vector<1x128xf32>
    %cst_43 = arith.constant dense<0.000000e+00> : vector<1x128xf32>
    %92 = tpu.matmul %91, %3, %cst_43 {dimension_numbers = #tpu.dot_dimension_numbers<[1], [0], [0], [1], [0, 0, 1, 1], [], []>} : vector<1x128xf32>, vector<128x128xf32>, vector<1x128xf32> -> vector<1x128xf32>
    %93 = arith.addf %92, %9 : vector<1x128xf32>
    %94 = vector.extract_strided_slice %93 {offsets = [0, 0], sizes = [1, 4], strides = [1, 1]} : vector<1x128xf32> to vector<1x4xf32>
    %95 = arith.mulf %94, %94 : vector<1x4xf32>
    %cst_44 = arith.constant dense<0.000000e+00> : vector<1xf32>
    %96 = vector.multi_reduction <add>, %95, %cst_44 [1] : vector<1x4xf32> to vector<1xf32>
    %97 = vector.shape_cast %96 : vector<1xf32> to vector<1x1xf32>
    %98 = math.rsqrt %97 : vector<1x1xf32>
    %99 = vector.broadcast %98 : vector<1x1xf32> to vector<1x4xf32>
    %100 = arith.mulf %94, %99 : vector<1x4xf32>
    %101 = vector.extract_strided_slice %93 {offsets = [0, 4], sizes = [1, 1], strides = [1, 1]} : vector<1x128xf32> to vector<1x1xf32>
    %102 = vector.extract_strided_slice %93 {offsets = [0, 5], sizes = [1, 3], strides = [1, 1]} : vector<1x128xf32> to vector<1x3xf32>
    %c0_45 = arith.constant 0 : index
    %c0_46 = arith.constant 0 : index
    %c0_47 = arith.constant 0 : index
    %103 = vector.load %arg4[%c0_45, %c0_46, %c0_47] : memref<1x1x4xf32, #tpu.memory_space<vmem>>, vector<1x1x3xf32>
    %104 = vector.shape_cast %103 : vector<1x1x3xf32> to vector<1x3xf32>
    %c0_48 = arith.constant 0 : index
    %c0_49 = arith.constant 0 : index
    %c3_50 = arith.constant 3 : index
    %105 = vector.load %arg4[%c0_48, %c0_49, %c3_50] : memref<1x1x4xf32, #tpu.memory_space<vmem>>, vector<1x1x1xf32>
    %106 = vector.shape_cast %105 : vector<1x1x1xf32> to vector<1x1xf32>
    %107 = arith.addf %84, %102 : vector<1x3xf32>
    %108 = vector.broadcast %106 : vector<1x1xf32> to vector<1x3xf32>
    %109 = arith.mulf %107, %108 : vector<1x3xf32>
    %110 = arith.addf %109, %104 : vector<1x3xf32>
    %111 = tpu.concatenate %110, %100, %101 in 1 : vector<1x3xf32>, vector<1x4xf32>, vector<1x1xf32> -> vector<1x8xf32>
    %c0_51 = arith.constant 0 : index
    %c0_52 = arith.constant 0 : index
    %c0_53 = arith.constant 0 : index
    %112 = vector.load %arg7[%c0_51, %c0_52, %c0_53] : memref<1x1x8xf32, #tpu.memory_space<vmem>>, vector<1x1x8xf32>
    %113 = vector.shape_cast %112 : vector<1x1x8xf32> to vector<1x8xf32>
    %114 = vector.shape_cast %111 : vector<1x8xf32> to vector<1x1x8xf32>
    tpu.vector_store %arg7[%c0_51, %c0_52, %c0_53], %114 {strides = array<i32>} : memref<1x1x8xf32, #tpu.memory_space<vmem>>, vector<1x1x8xf32>,
    %115 = vector.broadcast %106 : vector<1x1xf32> to vector<1x3xf32>
    %116 = arith.mulf %102, %115 : vector<1x3xf32>
    %c0_54 = arith.constant 0 : index
    %c0_55 = arith.constant 0 : index
    %c0_56 = arith.constant 0 : index
    %117 = vector.load %arg9[%c0_54, %c0_55, %c0_56] : memref<1x1x3xf32, #tpu.memory_space<vmem>>, vector<1x1x3xf32>
    %118 = vector.shape_cast %117 : vector<1x1x3xf32> to vector<1x3xf32>
    %119 = vector.shape_cast %116 : vector<1x3xf32> to vector<1x1x3xf32>
    tpu.vector_store %arg9[%c0_54, %c0_55, %c0_56], %119 {strides = array<i32>} : memref<1x1x3xf32, #tpu.memory_space<vmem>>, vector<1x1x3xf32>,
    return
  }
  func.func @transform_0(%arg0: i32) -> (i32, i32, i32) {
    %c0_i32 = arith.constant 0 : i32
    %c0_i32_0 = arith.constant 0 : i32
    %c0_i32_1 = arith.constant 0 : i32
    return %arg0, %c0_i32, %c0_i32_0 : i32, i32, i32
  }
  func.func @transform_1(%arg0: i32) -> (i32, i32, i32) {
    %c0_i32 = arith.constant 0 : i32
    %c0_i32_0 = arith.constant 0 : i32
    %c0_i32_1 = arith.constant 0 : i32
    return %arg0, %c0_i32, %c0_i32_0 : i32, i32, i32
  }
  func.func @transform_2(%arg0: i32) -> (i32, i32, i32) {
    %c0_i32 = arith.constant 0 : i32
    %c0_i32_0 = arith.constant 0 : i32
    %c0_i32_1 = arith.constant 0 : i32
    return %arg0, %c0_i32, %c0_i32_0 : i32, i32, i32
  }
  func.func @transform_3(%arg0: i32) -> (i32, i32, i32) {
    %c0_i32 = arith.constant 0 : i32
    %c0_i32_0 = arith.constant 0 : i32
    %c0_i32_1 = arith.constant 0 : i32
    return %arg0, %c0_i32, %c0_i32_0 : i32, i32, i32
  }
  func.func @transform_4(%arg0: i32) -> (i32, i32) {
    %c0_i32 = arith.constant 0 : i32
    %c0_i32_0 = arith.constant 0 : i32
    %c0_i32_1 = arith.constant 0 : i32
    return %c0_i32, %c0_i32_0 : i32, i32
  }
  func.func @transform_5(%arg0: i32) -> (i32, i32) {
    %c0_i32 = arith.constant 0 : i32
    %c0_i32_0 = arith.constant 0 : i32
    %c0_i32_1 = arith.constant 0 : i32
    return %c0_i32, %c0_i32_0 : i32, i32
  }
  func.func @transform_6(%arg0: i32) -> (i32, i32, i32) {
    %c0_i32 = arith.constant 0 : i32
    %c0_i32_0 = arith.constant 0 : i32
    %c0_i32_1 = arith.constant 0 : i32
    return %arg0, %c0_i32, %c0_i32_0 : i32, i32, i32
  }
  func.func @transform_7(%arg0: i32) -> (i32, i32, i32) {
    %c0_i32 = arith.constant 0 : i32
    %c0_i32_0 = arith.constant 0 : i32
    %c0_i32_1 = arith.constant 0 : i32
    return %arg0, %c0_i32, %c0_i32_0 : i32, i32, i32
  }
  func.func @transform_8(%arg0: i32) -> (i32, i32, i32) {
    %c0_i32 = arith.constant 0 : i32
    %c0_i32_0 = arith.constant 0 : i32
    %c0_i32_1 = arith.constant 0 : i32
    return %arg0, %c0_i32, %c0_i32_0 : i32, i32, i32
  }
}

</mosaic_0001>

<llo_original>
// kernel: _lambda_.1
$region0: #{_lambda_.1}
  #allocation0 [shape = 'u32[]', space=smem, size = 0x4, offset = 0x4, fixed_abs, tag = 'smem constant byte address 0x4 - core index']
  #allocation1 [shape = 'u32[144,128]{1,0:T(1,128)}', space=vmem, size = 0x12000, scoped, tag = 'internal scratch']
  %s0 = inlined_call_operand.hbm [shape: f32[2,128,256], index: 0, kind: input, shape index: {}]
  %s1 = inlined_call_operand.vmem [shape: f32[2,1,128], index: 1, kind: input, shape index: {}]
  %s2 = inlined_call_operand.vmem [shape: f32[2,128,3], index: 2, kind: input, shape index: {}]
  %s3 = inlined_call_operand.vmem [shape: f32[2,1,4], index: 3, kind: input, shape index: {}]
  %s4 = inlined_call_operand.hbm [shape: f32[640,128], index: 4, kind: input, shape index: {}]
  %s5 = inlined_call_operand.vmem [shape: f32[8,128], index: 5, kind: input, shape index: {}]
  %s6 = inlined_call_operand.hbm [shape: f32[2,1,8], index: 6, kind: output, shape index: {0}]
  %s7 = inlined_call_operand.vmem [shape: f32[2,128,1], index: 7, kind: output, shape index: {1}]
  %s8 = inlined_call_operand.hbm [shape: f32[2,1,3], index: 8, kind: output, shape index: {2}]
  %9 = xla_tuple %s6, %s7, %s8
  %s10 = sld [smem:[#allocation0]]
  $region81: #{_lambda_.1} parent=0
    _
  %s12 = ssub.s32 1, %s10
  %s13 = scalar_select 0, %s12, %s10
  $region1: #{_lambda_.1} parent=0
    #allocation2 [shape = 'u8[262144]{0}', space=vmem, size = 0x40000, scoped, tag = 'input window, operand 0']
    #allocation3 [shape = 's32[2]{0}', space=sflag, size = 0x8, scoped, tag = 'scoped memory for _lambda_.1']
    #allocation4 [shape = 's32[2]{0}', space=sflag, size = 0x8, scoped, tag = 'scoped memory for _lambda_.1']
    #allocation5 [shape = 'u8[327680]{0}', space=vmem, size = 0x50000, scoped, tag = 'input window, operand 4, single buffered']
    #allocation6 [shape = 's32[1]{0}', space=sflag, size = 0x4, scoped, tag = 'scoped memory for _lambda_.1']
    #allocation7 [shape = 'u8[1024]{0}', space=vmem, size = 0x400, scoped, tag = 'output window, operand 0']
    #allocation8 [shape = 'u8[1024]{0}', space=vmem, size = 0x400, scoped, tag = 'output window, operand 2']
    #allocation9 [shape = 's32[2]{0}', space=sflag, size = 0x8, scoped, tag = 'scoped memory for _lambda_.1']
    %14 = vsyncpa [#allocation3], 0
    %s15 = scalar_lea.sflag [#allocation3], 1
    %16 = vsyncpa %s15, 0
    %17 = vsyncpa [#allocation6], 0
    %18 = vsyncpa [#allocation4], 0
    %s19 = scalar_lea.sflag [#allocation4], 1
    %20 = vsyncpa %s19, 0
    %21 = vsyncpa [#allocation9], 0
    %s22 = scalar_lea.sflag [#allocation9], 1
    %23 = vsyncpa %s22, 0
    loop: start=0, step=1, limit=4
    $region2: #{_lambda_.1} parent=1 // loop_pre_header
      _
    $region3: #{_lambda_.1} parent=1 // loop_header
      %s25 = sphi 0, %s29
      %p26 = scmp.ge.s32.totalorder %s25, 4
      %s35 = sphi 0, %s37
      %s38 = sphi 0, %s35
      %s39 = sphi 0, %s38
      %s55 = sphi 0, %s39
      %s61 = sphi 0, %s63
      %s64 = sphi 0, %s61
      %s65 = sphi 0, %s64
      %s81 = sphi 0, %s65
      %s87 = sphi 0, %s89
      %s90 = sphi 0, %s87
      %s91 = sphi 0, %s90
      %s107 = sphi 0, %s91
      %s113 = sphi 0, %s115
      %s116 = sphi 0, %s113
      %s117 = sphi 0, %s116
      %s133 = sphi 0, %s117
      %s137 = sphi 0, %s137
      %s139 = sphi 0, %s137
      %s140 = sphi 0, %s139
      %s154 = sphi 0, %s140
      %s158 = sphi 0, %s158
      %s160 = sphi 0, %s158
      %s161 = sphi 0, %s160
      %s175 = sphi 0, %s161
      %s181 = sphi 0, %s183
      %s184 = sphi 0, %s181
      %s185 = sphi 0, %s184
      %s201 = sphi 0, %s185
      %s207 = sphi 0, %s209
      %s210 = sphi 0, %s207
      %s211 = sphi 0, %s210
      %s227 = sphi 0, %s211
      %s233 = sphi 0, %s235
      %s236 = sphi 0, %s233
      %s237 = sphi 0, %s236
      %s253 = sphi 0, %s237
    $region4: #{_lambda_.1} parent=1 // loop_header_branch
      %28 = sbr.rel (%p26) target = $region8
    $region5: #{_lambda_.1} parent=1 // loop_body
      %s30 = ssub.s32 %s25, 1
      %s31 = ssub.s32 %s25, 2
      %s32 = sadd.s32 %s25, 1
      %s33 = ssub.s32 %s25, %s32
      %p34 = scmp.eq.s32.totalorder %s33, 0
      %s36 = sadd.s32 %s35, 1
      %s37 = scalar_select %p34, %s35, %s36
      %p40 = pneg %p34
      %p41 = scmp.eq.s32.totalorder %s25, 1
      %p42 = por %p40, %p41
      %p43 = scmp.ne.s32.totalorder %s35, %s38
      %p44 = scmp.eq.s32.totalorder %s25, 0
      %p45 = por %p43, %p44
      %p46 = scmp.ne.s32.totalorder %s35, %s38
      %p47 = scmp.eq.s32.totalorder %s30, 1
      %p48 = por %p46, %p47
      %p49 = scmp.ne.s32.totalorder %s38, %s39
      %p50 = scmp.eq.s32.totalorder %s30, 0
      %p51 = por %p49, %p50
      %p52 = scmp.ne.s32.totalorder %s38, %s39
      %p53 = scmp.eq.s32.totalorder %s31, 1
      %p54 = por %p52, %p53
      %p56 = scmp.ne.s32.totalorder %s39, %s55
      %p57 = scmp.eq.s32.totalorder %s31, 0
      %p58 = por %p56, %p57
      %s59 = ssub.s32 %s25, %s32
      %p60 = scmp.eq.s32.totalorder %s59, 0
      %s62 = sadd.s32 %s61, 1
      %s63 = scalar_select %p60, %s61, %s62
      %p66 = pneg %p60
      %p67 = scmp.eq.s32.totalorder %s25, 1
      %p68 = por %p66, %p67
      %p69 = scmp.ne.s32.totalorder %s61, %s64
      %p70 = scmp.eq.s32.totalorder %s25, 0
      %p71 = por %p69, %p70
      %p72 = scmp.ne.s32.totalorder %s61, %s64
      %p73 = scmp.eq.s32.totalorder %s30, 1
      %p74 = por %p72, %p73
      %p75 = scmp.ne.s32.totalorder %s64, %s65
      %p76 = scmp.eq.s32.totalorder %s30, 0
      %p77 = por %p75, %p76
      %p78 = scmp.ne.s32.totalorder %s64, %s65
      %p79 = scmp.eq.s32.totalorder %s31, 1
      %p80 = por %p78, %p79
      %p82 = scmp.ne.s32.totalorder %s65, %s81
      %p83 = scmp.eq.s32.totalorder %s31, 0
      %p84 = por %p82, %p83
      %s85 = ssub.s32 %s25, %s32
      %p86 = scmp.eq.s32.totalorder %s85, 0
      %s88 = sadd.s32 %s87, 1
      %s89 = scalar_select %p86, %s87, %s88
      %p92 = pneg %p86
      %p93 = scmp.eq.s32.totalorder %s25, 1
      %p94 = por %p92, %p93
      %p95 = scmp.ne.s32.totalorder %s87, %s90
      %p96 = scmp.eq.s32.totalorder %s25, 0
      %p97 = por %p95, %p96
      %p98 = scmp.ne.s32.totalorder %s87, %s90
      %p99 = scmp.eq.s32.totalorder %s30, 1
      %p100 = por %p98, %p99
      %p101 = scmp.ne.s32.totalorder %s90, %s91
      %p102 = scmp.eq.s32.totalorder %s30, 0
      %p103 = por %p101, %p102
      %p104 = scmp.ne.s32.totalorder %s90, %s91
      %p105 = scmp.eq.s32.totalorder %s31, 1
      %p106 = por %p104, %p105
      %p108 = scmp.ne.s32.totalorder %s91, %s107
      %p109 = scmp.eq.s32.totalorder %s31, 0
      %p110 = por %p108, %p109
      %s111 = ssub.s32 %s25, %s32
      %p112 = scmp.eq.s32.totalorder %s111, 0
      %s114 = sadd.s32 %s113, 1
      %s115 = scalar_select %p112, %s113, %s114
      %p118 = pneg %p112
      %p119 = scmp.eq.s32.totalorder %s25, 1
      %p120 = por %p118, %p119
      %p121 = scmp.ne.s32.totalorder %s113, %s116
      %p122 = scmp.eq.s32.totalorder %s25, 0
      %p123 = por %p121, %p122
      %p124 = scmp.ne.s32.totalorder %s113, %s116
      %p125 = scmp.eq.s32.totalorder %s30, 1
      %p126 = por %p124, %p125
      %p127 = scmp.ne.s32.totalorder %s116, %s117
      %p128 = scmp.eq.s32.totalorder %s30, 0
      %p129 = por %p127, %p128
      %p130 = scmp.ne.s32.totalorder %s116, %s117
      %p131 = scmp.eq.s32.totalorder %s31, 1
      %p132 = por %p130, %p131
      %p134 = scmp.ne.s32.totalorder %s117, %s133
      %p135 = scmp.eq.s32.totalorder %s31, 0
      %p136 = por %p134, %p135
      %s138 = sadd.s32 %s137, 1
      %p141 = scmp.eq.s32.totalorder %s25, 1
      %p142 = scmp.ne.s32.totalorder %s137, %s139
      %p143 = scmp.eq.s32.totalorder %s25, 0
      %p144 = por %p142, %p143
      %p145 = scmp.ne.s32.totalorder %s137, %s139
      %p146 = scmp.eq.s32.totalorder %s30, 1
      %p147 = por %p145, %p146
      %p148 = scmp.ne.s32.totalorder %s139, %s140
      %p149 = scmp.eq.s32.totalorder %s30, 0
      %p150 = por %p148, %p149
      %p151 = scmp.ne.s32.totalorder %s139, %s140
      %p152 = scmp.eq.s32.totalorder %s31, 1
      %p153 = por %p151, %p152
      %p155 = scmp.ne.s32.totalorder %s140, %s154
      %p156 = scmp.eq.s32.totalorder %s31, 0
      %p157 = por %p155, %p156
      %s159 = sadd.s32 %s158, 1
      %p162 = scmp.eq.s32.totalorder %s25, 1
      %p163 = scmp.ne.s32.totalorder %s158, %s160
      %p164 = scmp.eq.s32.totalorder %s25, 0
      %p165 = por %p163, %p164
      %p166 = scmp.ne.s32.totalorder %s158, %s160
      %p167 = scmp.eq.s32.totalorder %s30, 1
      %p168 = por %p166, %p167
      %p169 = scmp.ne.s32.totalorder %s160, %s161
      %p170 = scmp.eq.s32.totalorder %s30, 0
      %p171 = por %p169, %p170
      %p172 = scmp.ne.s32.totalorder %s160, %s161
      %p173 = scmp.eq.s32.totalorder %s31, 1
      %p174 = por %p172, %p173
      %p176 = scmp.ne.s32.totalorder %s161, %s175
      %p177 = scmp.eq.s32.totalorder %s31, 0
      %p178 = por %p176, %p177
      %s179 = ssub.s32 %s25, %s32
      %p180 = scmp.eq.s32.totalorder %s179, 0
      %s182 = sadd.s32 %s181, 1
      %s183 = scalar_select %p180, %s181, %s182
      %p186 = pneg %p180
      %p187 = scmp.eq.s32.totalorder %s25, 1
      %p188 = por %p186, %p187
      %p189 = scmp.ne.s32.totalorder %s181, %s184
      %p190 = scmp.eq.s32.totalorder %s25, 0
      %p191 = por %p189, %p190
      %p192 = scmp.ne.s32.totalorder %s181, %s184
      %p193 = scmp.eq.s32.totalorder %s30, 1
      %p194 = por %p192, %p193
      %p195 = scmp.ne.s32.totalorder %s184, %s185
      %p196 = scmp.eq.s32.totalorder %s30, 0
      %p197 = por %p195, %p196
      %p198 = scmp.ne.s32.totalorder %s184, %s185
      %p199 = scmp.eq.s32.totalorder %s31, 1
      %p200 = por %p198, %p199
      %p202 = scmp.ne.s32.totalorder %s185, %s201
      %p203 = scmp.eq.s32.totalorder %s31, 0
      %p204 = por %p202, %p203
      %s205 = ssub.s32 %s25, %s32
      %p206 = scmp.eq.s32.totalorder %s205, 0
      %s208 = sadd.s32 %s207, 1
      %s209 = scalar_select %p206, %s207, %s208
      %p212 = pneg %p206
      %p213 = scmp.eq.s32.totalorder %s25, 1
      %p214 = por %p212, %p213
      %p215 = scmp.ne.s32.totalorder %s207, %s210
      %p216 = scmp.eq.s32.totalorder %s25, 0
      %p217 = por %p215, %p216
      %p218 = scmp.ne.s32.totalorder %s207, %s210
      %p219 = scmp.eq.s32.totalorder %s30, 1
      %p220 = por %p218, %p219
      %p221 = scmp.ne.s32.totalorder %s210, %s211
      %p222 = scmp.eq.s32.totalorder %s30, 0
      %p223 = por %p221, %p222
      %p224 = scmp.ne.s32.totalorder %s210, %s211
      %p225 = scmp.eq.s32.totalorder %s31, 1
      %p226 = por %p224, %p225
      %p228 = scmp.ne.s32.totalorder %s211, %s227
      %p229 = scmp.eq.s32.totalorder %s31, 0
      %p230 = por %p228, %p229
      %s231 = ssub.s32 %s25, %s32
      %p232 = scmp.eq.s32.totalorder %s231, 0
      %s234 = sadd.s32 %s233, 1
      %s235 = scalar_select %p232, %s233, %s234
      %p238 = pneg %p232
      %p239 = scmp.eq.s32.totalorder %s25, 1
      %p240 = por %p238, %p239
      %p241 = scmp.ne.s32.totalorder %s233, %s236
      %p242 = scmp.eq.s32.totalorder %s25, 0
      %p243 = por %p241, %p242
      %p244 = scmp.ne.s32.totalorder %s233, %s236
      %p245 = scmp.eq.s32.totalorder %s30, 1
      %p246 = por %p244, %p245
      %p247 = scmp.ne.s32.totalorder %s236, %s237
      %p248 = scmp.eq.s32.totalorder %s30, 0
      %p249 = por %p247, %p248
      %p250 = scmp.ne.s32.totalorder %s236, %s237
      %p251 = scmp.eq.s32.totalorder %s31, 1
      %p252 = por %p250, %p251
      %p254 = scmp.ne.s32.totalorder %s237, %s253
      %p255 = scmp.eq.s32.totalorder %s31, 0
      %p256 = por %p254, %p255
      %p257 = scmp.le.s32.totalorder 1, %s25
      %p258 = scmp.lt.s32.totalorder %s25, 3
      %p259 = pnand %p257, %p258
      %p260 = pneg %p259
      // Predicated region
      $region9: #{_lambda_.1} parent=5 // pred_check
        _
      $region10: #{_lambda_.1} parent=5 // pred_check_branch
        %262 = sbr.rel (%p259) target = $region12
      $region11: #{_lambda_.1} parent=5 // pred_region
        %s263 = ssub.s32 %s25, 1
        // Predicated region
        $region13: #{_lambda_.1} parent=11 // pred_check
          %p264 = pneg %p150
        $region14: #{_lambda_.1} parent=11 // pred_check_branch
          %266 = sbr.rel (%p264) target = $region16
        $region15: #{_lambda_.1} parent=11 // pred_region
          %s268 = ssub.s32 10240, 10240
          %269 = vsyncadd [#allocation6], %s268
          %s270 = sshll.u32 [#allocation5], 4
          %s271 = int_to_ptr.vmem [resolvable:$true] %s270
          %276 = dma.hbm_to_vmem [thread:$0]  %s4, 10240, %s271, [#allocation6], 128, 128, 8
        $region16: #{_lambda_.1} parent=11 // pred_fallthru
          _
        // Predicated region
        $region17: #{_lambda_.1} parent=11 // pred_check
          %p277 = pneg %p171
        $region18: #{_lambda_.1} parent=11 // pred_check_branch
          %279 = sbr.rel (%p277) target = $region20
        $region19: #{_lambda_.1} parent=11 // pred_region
          _
        $region20: #{_lambda_.1} parent=11 // pred_fallthru
          _
      $region12: #{_lambda_.1} parent=5 // pred_fallthru
        _
      %p280 = scmp.lt.s32.totalorder %s25, 2
      // Predicated region
      $region21: #{_lambda_.1} parent=5 // pred_check
        %p281 = pneg %p280
      $region22: #{_lambda_.1} parent=5 // pred_check_branch
        %283 = sbr.rel (%p281) target = $region24
      $region23: #{_lambda_.1} parent=5 // pred_region
        // Predicated region
        $region25: #{_lambda_.1} parent=23 // pred_check
          %p284 = pneg %p45
        $region26: #{_lambda_.1} parent=23 // pred_check_branch
          %286 = sbr.rel (%p284) target = $region28
        $region27: #{_lambda_.1} parent=23 // pred_region
          %s287 = sand.u32 %s35, 1
          %s288 = scalar_lea.sflag [#allocation3], %s287
          %s289 = sand.u32 %s35, 1
          %s290 = smul.addr %s289, 256
          %s291 = scalar_lea.vmem [#allocation2], %s290
          %s293 = ssub.s32 4096, 4096
          %294 = vsyncadd %s288, %s293
          %s295 = smul.addr %s25, 32
          %s296 = smul.addr %s295, 128
          %s297 = scalar_lea.hbm %s0, %s296
          %s298 = sshll.u32 %s291, 4
          %s299 = int_to_ptr.vmem [resolvable:$true] %s298
          %304 = dma.hbm_to_vmem [thread:$0]  %s297, 4096, %s299, %s288, 256, 256, 16
        $region28: #{_lambda_.1} parent=23 // pred_fallthru
          _
        // Predicated region
        $region29: #{_lambda_.1} parent=23 // pred_check
          %p305 = pneg %p71
        $region30: #{_lambda_.1} parent=23 // pred_check_branch
          %307 = sbr.rel (%p305) target = $region32
        $region31: #{_lambda_.1} parent=23 // pred_region
          %p308 = scmp.lt.s32.totalorder %s25, 1
          %s309 = scalar_select %p308, %s25, 1
          %s310 = scalar_lea.vmem %s1, %s309
        $region32: #{_lambda_.1} parent=23 // pred_fallthru
          _
        // Predicated region
        $region33: #{_lambda_.1} parent=23 // pred_check
          %p311 = pneg %p97
        $region34: #{_lambda_.1} parent=23 // pred_check_branch
          %313 = sbr.rel (%p311) target = $region36
        $region35: #{_lambda_.1} parent=23 // pred_region
          %p314 = scmp.lt.s32.totalorder %s25, 1
          %s315 = scalar_select %p314, %s25, 1
          %s316 = smul.addr %s315, 16
          %s317 = smul.addr %s316, 8
          %s318 = scalar_lea.vmem %s2, %s317
        $region36: #{_lambda_.1} parent=23 // pred_fallthru
          _
        // Predicated region
        $region37: #{_lambda_.1} parent=23 // pred_check
          %p319 = pneg %p123
        $region38: #{_lambda_.1} parent=23 // pred_check_branch
          %321 = sbr.rel (%p319) target = $region40
        $region39: #{_lambda_.1} parent=23 // pred_region
          %p322 = scmp.lt.s32.totalorder %s25, 1
          %s323 = scalar_select %p322, %s25, 1
          %s324 = scalar_lea.vmem %s3, %s323
        $region40: #{_lambda_.1} parent=23 // pred_fallthru
          _
      $region24: #{_lambda_.1} parent=5 // pred_fallthru
        _
      %p325 = scmp.le.s32.totalorder 1, %s25
      %p326 = scmp.lt.s32.totalorder %s25, 3
      %p327 = pnand %p325, %p326
      %p328 = pneg %p327
      // Predicated region
      $region41: #{_lambda_.1} parent=5 // pred_check
        _
      $region42: #{_lambda_.1} parent=5 // pred_check_branch
        %330 = sbr.rel (%p327) target = $region44
      $region43: #{_lambda_.1} parent=5 // pred_region
        %s331 = ssub.s32 %s25, 1
        %s332 = sand.u32 %s38, 1
        %s333 = scalar_lea.sflag [#allocation3], %s332
        %s334 = sand.u32 %s38, 1
        %s335 = smul.addr %s334, 256
        %s336 = scalar_lea.vmem [#allocation2], %s335
        // Predicated region
        $region45: #{_lambda_.1} parent=43 // pred_check
          %p337 = pneg %p51
        $region46: #{_lambda_.1} parent=43 // pred_check_branch
          %339 = sbr.rel (%p337) target = $region48
        $region47: #{_lambda_.1} parent=43 // pred_region
          %340 = dma.done %s333, 4096
        $region48: #{_lambda_.1} parent=43 // pred_fallthru
          _
        // Predicated region
        $region49: #{_lambda_.1} parent=43 // pred_check
          %p341 = pneg %p150
        $region50: #{_lambda_.1} parent=43 // pred_check_branch
          %343 = sbr.rel (%p341) target = $region52
        $region51: #{_lambda_.1} parent=43 // pred_region
          %344 = dma.done [#allocation6], 10240
        $region52: #{_lambda_.1} parent=43 // pred_fallthru
          _
        %s345 = sand.u32 %s38, 1
        %s346 = scalar_lea.sflag [#allocation3], %s345
        %s347 = sand.u32 %s38, 1
        %s348 = smul.addr %s347, 256
        %s349 = scalar_lea.vmem [#allocation2], %s348
        %p350 = pneg %p51
        %p351 = pneg %p48
        %p352 = scmp.lt.s32.totalorder %s30, 1
        %s353 = scalar_select %p352, %s30, 1
        %s354 = scalar_lea.vmem %s1, %s353
        %p355 = pneg %p77
        %p356 = pneg %p74
        %p357 = scmp.lt.s32.totalorder %s30, 1
        %s358 = scalar_select %p357, %s30, 1
        %s359 = smul.addr %s358, 16
        %s360 = smul.addr %s359, 8
        %s361 = scalar_lea.vmem %s2, %s360
        %p362 = pneg %p103
        %p363 = pneg %p100
        %p364 = scmp.lt.s32.totalorder %s30, 1
        %s365 = scalar_select %p364, %s30, 1
        %s366 = scalar_lea.vmem %s3, %s365
        %p367 = pneg %p129
        %p368 = pneg %p126
        %p369 = pneg %p150
        %p370 = pneg %p147
        %p371 = pneg %p171
        %p372 = pneg %p168
        %p373 = pneg %p197
        %p374 = pneg %p194
        %s375 = sand.u32 %s184, 1
        %s376 = scalar_lea.sflag [#allocation4], %s375
        %s377 = sand.u32 %s184, 1
        %s378 = scalar_lea.vmem [#allocation7], %s377
        %p379 = pneg %p223
        %p380 = pneg %p220
        %p381 = scmp.lt.s32.totalorder %s30, 1
        %s382 = scalar_select %p381, %s30, 1
        %s383 = smul.addr %s382, 16
        %s384 = smul.addr %s383, 8
        %s385 = scalar_lea.vmem %s7, %s384
        %p386 = pneg %p249
        %p387 = pneg %p246
        %s388 = sand.u32 %s236, 1
        %s389 = scalar_lea.sflag [#allocation9], %s388
        %s390 = sand.u32 %s236, 1
        %s391 = scalar_lea.vmem [#allocation8], %s390
        %p392 = scmp.lt.s32.totalorder %s30, 1
        %s393 = scalar_select %p392, %s30, 1
        %s394 = scalar_lea.vmem %s1, %s393
        %p395 = scmp.lt.s32.totalorder %s30, 1
        %s396 = scalar_select %p395, %s30, 1
        %s397 = smul.addr %s396, 16
        %s398 = smul.addr %s397, 8
        %s399 = scalar_lea.vmem %s2, %s398
        %p400 = scmp.lt.s32.totalorder %s30, 1
        %s401 = scalar_select %p400, %s30, 1
        %s402 = scalar_lea.vmem %s3, %s401
        %p403 = scmp.lt.s32.totalorder %s30, 1
        %s404 = scalar_select %p403, %s30, 1
        %s405 = smul.addr %s404, 16
        %s406 = smul.addr %s405, 8
        %s407 = scalar_lea.vmem %s7, %s406
        %v408 = vld [vmem:[#allocation5] sm:$0xff]
        %v409 = vld [vmem:[#allocation5 + $0x8] sm:$0xff]
        %v410 = vld [vmem:[#allocation5 + $0x10] sm:$0xff]
        %v411 = vld [vmem:[#allocation5 + $0x18] sm:$0xff]
        %v412 = vld [vmem:[#allocation5 + $0x20] sm:$0xff]
        %v413 = vld [vmem:[#allocation5 + $0x28] sm:$0xff]
        %v414 = vld [vmem:[#allocation5 + $0x30] sm:$0xff]
        %v415 = vld [vmem:[#allocation5 + $0x38] sm:$0xff]
        %v416 = vld [vmem:[#allocation5 + $0x40] sm:$0xff]
        %v417 = vld [vmem:[#allocation5 + $0x48] sm:$0xff]
        %v418 = vld [vmem:[#allocation5 + $0x50] sm:$0xff]
        %v419 = vld [vmem:[#allocation5 + $0x58] sm:$0xff]
        %v420 = vld [vmem:[#allocation5 + $0x60] sm:$0xff]
        %v421 = vld [vmem:[#allocation5 + $0x68] sm:$0xff]
        %v422 = vld [vmem:[#allocation5 + $0x70] sm:$0xff]
        %v423 = vld [vmem:[#allocation5 + $0x78] sm:$0xff]
        %v424 = vld [vmem:[#allocation5 + $0x80] sm:$0xff]
        %v425 = vld [vmem:[#allocation5 + $0x88] sm:$0xff]
        %v426 = vld [vmem:[#allocation5 + $0x90] sm:$0xff]
        %v427 = vld [vmem:[#allocation5 + $0x98] sm:$0xff]
        %v428 = vld [vmem:[#allocation5 + $0xa0] sm:$0xff]
        %v429 = vld [vmem:[#allocation5 + $0xa8] sm:$0xff]
        %v430 = vld [vmem:[#allocation5 + $0xb0] sm:$0xff]
        %v431 = vld [vmem:[#allocation5 + $0xb8] sm:$0xff]
        %v432 = vld [vmem:[#allocation5 + $0xc0] sm:$0xff]
        %v433 = vld [vmem:[#allocation5 + $0xc8] sm:$0xff]
        %v434 = vld [vmem:[#allocation5 + $0xd0] sm:$0xff]
        %v435 = vld [vmem:[#allocation5 + $0xd8] sm:$0xff]
        %v436 = vld [vmem:[#allocation5 + $0xe0] sm:$0xff]
        %v437 = vld [vmem:[#allocation5 + $0xe8] sm:$0xff]
        %v438 = vld [vmem:[#allocation5 + $0xf0] sm:$0xff]
        %v439 = vld [vmem:[#allocation5 + $0xf8] sm:$0xff]
        %v440 = vld [vmem:[#allocation5 + $0x100] sm:$0xff]
        %v441 = vld [vmem:[#allocation5 + $0x108] sm:$0xff]
        %v442 = vld [vmem:[#allocation5 + $0x110] sm:$0xff]
        %v443 = vld [vmem:[#allocation5 + $0x118] sm:$0xff]
        %v444 = vld [vmem:[#allocation5 + $0x120] sm:$0xff]
        %v445 = vld [vmem:[#allocation5 + $0x128] sm:$0xff]
        %v446 = vld [vmem:[#allocation5 + $0x130] sm:$0xff]
        %v447 = vld [vmem:[#allocation5 + $0x138] sm:$0xff]
        %v448 = vld [vmem:[#allocation5 + $0x140] sm:$0xff]
        %v449 = vld [vmem:[#allocation5 + $0x148] sm:$0xff]
        %v450 = vld [vmem:[#allocation5 + $0x150] sm:$0xff]
        %v451 = vld [vmem:[#allocation5 + $0x158] sm:$0xff]
        %v452 = vld [vmem:[#allocation5 + $0x160] sm:$0xff]
        %v453 = vld [vmem:[#allocation5 + $0x168] sm:$0xff]
        %v454 = vld [vmem:[#allocation5 + $0x170] sm:$0xff]
        %v455 = vld [vmem:[#allocation5 + $0x178] sm:$0xff]
        %v456 = vld [vmem:[#allocation5 + $0x180] sm:$0xff]
        %v457 = vld [vmem:[#allocation5 + $0x188] sm:$0xff]
        %v458 = vld [vmem:[#allocation5 + $0x190] sm:$0xff]
        %v459 = vld [vmem:[#allocation5 + $0x198] sm:$0xff]
        %v460 = vld [vmem:[#allocation5 + $0x1a0] sm:$0xff]
        %v461 = vld [vmem:[#allocation5 + $0x1a8] sm:$0xff]
        %v462 = vld [vmem:[#allocation5 + $0x1b0] sm:$0xff]
        %v463 = vld [vmem:[#allocation5 + $0x1b8] sm:$0xff]
        %v464 = vld [vmem:[#allocation5 + $0x1c0] sm:$0xff]
        %v465 = vld [vmem:[#allocation5 + $0x1c8] sm:$0xff]
        %v466 = vld [vmem:[#allocation5 + $0x1d0] sm:$0xff]
        %v467 = vld [vmem:[#allocation5 + $0x1d8] sm:$0xff]
        %v468 = vld [vmem:[#allocation5 + $0x1e0] sm:$0xff]
        %v469 = vld [vmem:[#allocation5 + $0x1e8] sm:$0xff]
        %v470 = vld [vmem:[#allocation5 + $0x1f0] sm:$0xff]
        %v471 = vld [vmem:[#allocation5 + $0x1f8] sm:$0xff]
        %v472 = vld [vmem:[#allocation5 + $0x200] sm:$0xff]
        %v473 = vld [vmem:[#allocation5 + $0x208] sm:$0xff]
        %v474 = vld [vmem:[#allocation5 + $0x210] sm:$0xff]
        %v475 = vld [vmem:[#allocation5 + $0x218] sm:$0xff]
        %v476 = vld [vmem:[#allocation5 + $0x220] sm:$0xff]
        %v477 = vld [vmem:[#allocation5 + $0x228] sm:$0xff]
        %v478 = vld [vmem:[#allocation5 + $0x230] sm:$0xff]
        %v479 = vld [vmem:[#allocation5 + $0x238] sm:$0xff]
        %v480 = vld [vmem:[#allocation5 + $0x240] sm:$0xff]
        %v481 = vld [vmem:[#allocation5 + $0x248] sm:$0xff]
        %v482 = vld [vmem:[#allocation5 + $0x250] sm:$0xff]
        %v483 = vld [vmem:[#allocation5 + $0x258] sm:$0xff]
        %v484 = vld [vmem:[#allocation5 + $0x260] sm:$0xff]
        %v485 = vld [vmem:[#allocation5 + $0x268] sm:$0xff]
        %v486 = vld [vmem:[#allocation5 + $0x270] sm:$0xff]
        %v487 = vld [vmem:[#allocation5 + $0x278] sm:$0xff]
        %v488 = vld [vmem:[%s5] sm:$0x1]
        %v489 = vld [vmem:[%s5 + $0x1] sm:$0x1]
        %v490 = vld [vmem:[%s5 + $0x2] sm:$0x1]
        %v491 = vld [vmem:[%s5 + $0x3] sm:$0x1]
        %v492 = vld [vmem:[%s5 + $0x4] sm:$0x1]
        %v493 = vld [vmem:[%s5 + $0x5] sm:$0x1]
        %v494 = vld [vmem:[%s336] sm:$0xff]
        %v495 = vld [vmem:[%s336 + $0x8] sm:$0xff]
        %v496 = vld [vmem:[%s336 + $0x10] sm:$0xff]
        %v497 = vld [vmem:[%s336 + $0x18] sm:$0xff]
        %v498 = vld [vmem:[%s336 + $0x20] sm:$0xff]
        %v499 = vld [vmem:[%s336 + $0x28] sm:$0xff]
        %v500 = vld [vmem:[%s336 + $0x30] sm:$0xff]
        %v501 = vld [vmem:[%s336 + $0x38] sm:$0xff]
        %v502 = vld [vmem:[%s336 + $0x40] sm:$0xff]
        %v503 = vld [vmem:[%s336 + $0x48] sm:$0xff]
        %v504 = vld [vmem:[%s336 + $0x50] sm:$0xff]
        %v505 = vld [vmem:[%s336 + $0x58] sm:$0xff]
        %v506 = vld [vmem:[%s336 + $0x60] sm:$0xff]
        %v507 = vld [vmem:[%s336 + $0x68] sm:$0xff]
        %v508 = vld [vmem:[%s336 + $0x70] sm:$0xff]
        %v509 = vld [vmem:[%s336 + $0x78] sm:$0xff]
        %v510 = vld [vmem:[%s336 + $0x80] sm:$0xff]
        %v511 = vld [vmem:[%s336 + $0x88] sm:$0xff]
        %v512 = vld [vmem:[%s336 + $0x90] sm:$0xff]
        %v513 = vld [vmem:[%s336 + $0x98] sm:$0xff]
        %v514 = vld [vmem:[%s336 + $0xa0] sm:$0xff]
        %v515 = vld [vmem:[%s336 + $0xa8] sm:$0xff]
        %v516 = vld [vmem:[%s336 + $0xb0] sm:$0xff]
        %v517 = vld [vmem:[%s336 + $0xb8] sm:$0xff]
        %v518 = vld [vmem:[%s336 + $0xc0] sm:$0xff]
        %v519 = vld [vmem:[%s336 + $0xc8] sm:$0xff]
        %v520 = vld [vmem:[%s336 + $0xd0] sm:$0xff]
        %v521 = vld [vmem:[%s336 + $0xd8] sm:$0xff]
        %v522 = vld [vmem:[%s336 + $0xe0] sm:$0xff]
        %v523 = vld [vmem:[%s336 + $0xe8] sm:$0xff]
        %v524 = vld [vmem:[%s336 + $0xf0] sm:$0xff]
        %v525 = vld [vmem:[%s336 + $0xf8] sm:$0xff]
        %v526 = vlaneseq
        %v527 = vshrl.u32 %v526, 7
        %v528 = vsub.s32 0, %v527
        %v529 = vrot.slane %v488, %v528
        %530 = vmatprep.subr.mxu0 0.0
        %531 = vmatpush1.msra.mxu0 %v423
        %532 = vmatprep.subr.mxu0 0.0
        %533 = vmatpush1.msra.mxu0 %v422
        %534 = vmatprep.subr.mxu0 0.0
        %535 = vmatpush1.msra.mxu0 %v421
        %536 = vmatprep.subr.mxu0 0.0
        %537 = vmatpush1.msra.mxu0 %v420
        %538 = vmatprep.subr.mxu0 0.0
        %539 = vmatpush1.msra.mxu0 %v419
        %540 = vmatprep.subr.mxu0 0.0
        %541 = vmatpush1.msra.mxu0 %v418
        %542 = vmatprep.subr.mxu0 0.0
        %543 = vmatpush1.msra.mxu0 %v417
        %544 = vmatprep.subr.mxu0 0.0
        %545 = vmatpush1.msra.mxu0 %v416
        %546 = vmatprep.subr.mxu0 0.0
        %547 = vmatpush1.msra.mxu0 %v415
        %548 = vmatprep.subr.mxu0 0.0
        %549 = vmatpush1.msra.mxu0 %v414
        %550 = vmatprep.subr.mxu0 0.0
        %551 = vmatpush1.msra.mxu0 %v413
        %552 = vmatprep.subr.mxu0 0.0
        %553 = vmatpush1.msra.mxu0 %v412
        %554 = vmatprep.subr.mxu0 0.0
        %555 = vmatpush1.msra.mxu0 %v411
        %556 = vmatprep.subr.mxu0 0.0
        %557 = vmatpush1.msra.mxu0 %v410
        %558 = vmatprep.subr.mxu0 0.0
        %559 = vmatpush1.msra.mxu0 %v409
        %560 = vmatprep.subr.mxu0 0.0
        %561 = vmatpush1.msra.mxu0 %v408
        %562 = vmatprep.subr.mxu0 0.0
        %563 = vmatpush2.msra.mxu0 %v439
        %564 = vmatprep.subr.mxu0 0.0
        %565 = vmatpush2.msra.mxu0 %v438
        %566 = vmatprep.subr.mxu0 0.0
        %567 = vmatpush2.msra.mxu0 %v437
        %568 = vmatprep.subr.mxu0 0.0
        %569 = vmatpush2.msra.mxu0 %v436
        %570 = vmatprep.subr.mxu0 0.0
        %571 = vmatpush2.msra.mxu0 %v435
        %572 = vmatprep.subr.mxu0 0.0
        %573 = vmatpush2.msra.mxu0 %v434
        %574 = vmatprep.subr.mxu0 0.0
        %575 = vmatpush2.msra.mxu0 %v433
        %576 = vmatprep.subr.mxu0 0.0
        %577 = vmatpush2.msra.mxu0 %v432
        %578 = vmatprep.subr.mxu0 0.0
        %579 = vmatpush2.msra.mxu0 %v431
        %580 = vmatprep.subr.mxu0 0.0
        %581 = vmatpush2.msra.mxu0 %v430
        %582 = vmatprep.subr.mxu0 0.0
        %583 = vmatpush2.msra.mxu0 %v429
        %584 = vmatprep.subr.mxu0 0.0
        %585 = vmatpush2.msra.mxu0 %v428
        %586 = vmatprep.subr.mxu0 0.0
        %587 = vmatpush2.msra.mxu0 %v427
        %588 = vmatprep.subr.mxu0 0.0
        %589 = vmatpush2.msra.mxu0 %v426
        %590 = vmatprep.subr.mxu0 0.0
        %591 = vmatpush2.msra.mxu0 %v425
        %592 = vmatprep.subr.mxu0 0.0
        %593 = vmatpush2.msra.mxu0 %v424
        %594 = vmatprep.mubr.f32.mxu0 %v495
        %595 = vmatmul.mubr.f32.gmra.mxu0 %v494
        %v596 = vpop.f32.mrf.mxu0
        %v597 = vadd.f32 %v529, %v596
        %v598 = vpop.f32.mrf.mxu0
        %599 = vmatprep.mubr.f32.mxu0 %v497
        %600 = vmatmul.mubr.f32.gmra.mxu0 %v496
        %v601 = vpop.f32.mrf.mxu0
        %v602 = vadd.f32 %v529, %v601
        %v603 = vpop.f32.mrf.mxu0
        %604 = vmatprep.mubr.f32.mxu0 %v499
        %605 = vmatmul.mubr.f32.gmra.mxu0 %v498
        %v606 = vpop.f32.mrf.mxu0
        %v607 = vadd.f32 %v529, %v606
        %v608 = vpop.f32.mrf.mxu0
        %609 = vmatprep.mubr.f32.mxu0 %v501
        %610 = vmatmul.mubr.f32.gmra.mxu0 %v500
        %v611 = vpop.f32.mrf.mxu0
        %v612 = vadd.f32 %v529, %v611
        %v613 = vpop.f32.mrf.mxu0
        %614 = vmatprep.mubr.f32.mxu0 %v503
        %615 = vmatmul.mubr.f32.gmra.mxu0 %v502
        %v616 = vpop.f32.mrf.mxu0
        %v617 = vadd.f32 %v529, %v616
        %v618 = vpop.f32.mrf.mxu0
        %619 = vmatprep.mubr.f32.mxu0 %v505
        %620 = vmatmul.mubr.f32.gmra.mxu0 %v504
        %v621 = vpop.f32.mrf.mxu0
        %v622 = vadd.f32 %v529, %v621
        %v623 = vpop.f32.mrf.mxu0
        %624 = vmatprep.mubr.f32.mxu0 %v507
        %625 = vmatmul.mubr.f32.gmra.mxu0 %v506
        %v626 = vpop.f32.mrf.mxu0
        %v627 = vadd.f32 %v529, %v626
        %v628 = vpop.f32.mrf.mxu0
        %629 = vmatprep.mubr.f32.mxu0 %v509
        %630 = vmatmul.mubr.f32.gmra.mxu0 %v508
        %v631 = vpop.f32.mrf.mxu0
        %v632 = vadd.f32 %v529, %v631
        %v633 = vpop.f32.mrf.mxu0
        %634 = vmatprep.mubr.f32.mxu0 %v511
        %635 = vmatmul.mubr.f32.gmra.mxu0 %v510
        %v636 = vpop.f32.mrf.mxu0
        %v637 = vadd.f32 %v529, %v636
        %v638 = vpop.f32.mrf.mxu0
        %639 = vmatprep.mubr.f32.mxu0 %v513
        %640 = vmatmul.mubr.f32.gmra.mxu0 %v512
        %v641 = vpop.f32.mrf.mxu0
        %v642 = vadd.f32 %v529, %v641
        %v643 = vpop.f32.mrf.mxu0
        %644 = vmatprep.mubr.f32.mxu0 %v515
        %645 = vmatmul.mubr.f32.gmra.mxu0 %v514
        %v646 = vpop.f32.mrf.mxu0
        %v647 = vadd.f32 %v529, %v646
        %v648 = vpop.f32.mrf.mxu0
        %649 = vmatprep.mubr.f32.mxu0 %v517
        %650 = vmatmul.mubr.f32.gmra.mxu0 %v516
        %v651 = vpop.f32.mrf.mxu0
        %v652 = vadd.f32 %v529, %v651
        %v653 = vpop.f32.mrf.mxu0
        %654 = vmatprep.mubr.f32.mxu0 %v519
        %655 = vmatmul.mubr.f32.gmra.mxu0 %v518
        %v656 = vpop.f32.mrf.mxu0
        %v657 = vadd.f32 %v529, %v656
        %v658 = vpop.f32.mrf.mxu0
        %659 = vmatprep.mubr.f32.mxu0 %v521
        %660 = vmatmul.mubr.f32.gmra.mxu0 %v520
        %v661 = vpop.f32.mrf.mxu0
        %v662 = vadd.f32 %v529, %v661
        %v663 = vpop.f32.mrf.mxu0
        %664 = vmatprep.mubr.f32.mxu0 %v523
        %665 = vmatmul.mubr.f32.gmra.mxu0 %v522
        %v666 = vpop.f32.mrf.mxu0
        %v667 = vadd.f32 %v529, %v666
        %v668 = vpop.f32.mrf.mxu0
        %669 = vmatprep.mubr.f32.mxu0 %v525
        %670 = vmatmul.mubr.f32.gmra.mxu0 %v524
        %v671 = vpop.f32.mrf.mxu0
        %v672 = vadd.f32 %v529, %v671
        %v673 = vpop.f32.mrf.mxu0
        %674 = vdwg.mxu0
        %vm675 = vcmp.ge.f32.partialorder %v597, 0.0
        %vm676 = vcmp.ge.f32.partialorder %v602, 0.0
        %vm677 = vcmp.ge.f32.partialorder %v607, 0.0
        %vm678 = vcmp.ge.f32.partialorder %v612, 0.0
        %vm679 = vcmp.ge.f32.partialorder %v617, 0.0
        %vm680 = vcmp.ge.f32.partialorder %v622, 0.0
        %vm681 = vcmp.ge.f32.partialorder %v627, 0.0
        %vm682 = vcmp.ge.f32.partialorder %v632, 0.0
        %vm683 = vcmp.ge.f32.partialorder %v637, 0.0
        %vm684 = vcmp.ge.f32.partialorder %v642, 0.0
        %vm685 = vcmp.ge.f32.partialorder %v647, 0.0
        %vm686 = vcmp.ge.f32.partialorder %v652, 0.0
        %vm687 = vcmp.ge.f32.partialorder %v657, 0.0
        %vm688 = vcmp.ge.f32.partialorder %v662, 0.0
        %vm689 = vcmp.ge.f32.partialorder %v667, 0.0
        %vm690 = vcmp.ge.f32.partialorder %v672, 0.0
        %v691 = vmul.f32 %v597, 0.02
        %v692 = vmul.f32 %v602, 0.02
        %v693 = vmul.f32 %v607, 0.02
        %v694 = vmul.f32 %v612, 0.02
        %v695 = vmul.f32 %v617, 0.02
        %v696 = vmul.f32 %v622, 0.02
        %v697 = vmul.f32 %v627, 0.02
        %v698 = vmul.f32 %v632, 0.02
        %v699 = vmul.f32 %v637, 0.02
        %v700 = vmul.f32 %v642, 0.02
        %v701 = vmul.f32 %v647, 0.02
        %v702 = vmul.f32 %v652, 0.02
        %v703 = vmul.f32 %v657, 0.02
        %v704 = vmul.f32 %v662, 0.02
        %v705 = vmul.f32 %v667, 0.02
        %v706 = vmul.f32 %v672, 0.02
        %v707 = vsel %vm675, %v597, %v691
        %v708 = vsel %vm676, %v602, %v692
        %v709 = vsel %vm677, %v607, %v693
        %v710 = vsel %vm678, %v612, %v694
        %v711 = vsel %vm679, %v617, %v695
        %v712 = vsel %vm680, %v622, %v696
        %v713 = vsel %vm681, %v627, %v697
        %v714 = vsel %vm682, %v632, %v698
        %v715 = vsel %vm683, %v637, %v699
        %v716 = vsel %vm684, %v642, %v700
        %v717 = vsel %vm685, %v647, %v701
        %v718 = vsel %vm686, %v652, %v702
        %v719 = vsel %vm687, %v657, %v703
        %v720 = vsel %vm688, %v662, %v704
        %v721 = vsel %vm689, %v667, %v705
        %v722 = vsel %vm690, %v672, %v706
        %723 = vadd.xlane.f32.xlu0 %v707
        %v724 = vpop.xlane.xlu0 %723
        %725 = vadd.xlane.f32.xlu0 %v708
        %v726 = vpop.xlane.xlu0 %725
        %727 = vadd.xlane.f32.xlu0 %v709
        %v728 = vpop.xlane.xlu0 %727
        %729 = vadd.xlane.f32.xlu0 %v710
        %v730 = vpop.xlane.xlu0 %729
        %731 = vadd.xlane.f32.xlu0 %v711
        %v732 = vpop.xlane.xlu0 %731
        %733 = vadd.xlane.f32.xlu0 %v712
        %v734 = vpop.xlane.xlu0 %733
        %735 = vadd.xlane.f32.xlu0 %v713
        %v736 = vpop.xlane.xlu0 %735
        %737 = vadd.xlane.f32.xlu0 %v714
        %v738 = vpop.xlane.xlu0 %737
        %739 = vadd.xlane.f32.xlu0 %v715
        %v740 = vpop.xlane.xlu0 %739
        %741 = vadd.xlane.f32.xlu0 %v716
        %v742 = vpop.xlane.xlu0 %741
        %743 = vadd.xlane.f32.xlu0 %v717
        %v744 = vpop.xlane.xlu0 %743
        %745 = vadd.xlane.f32.xlu0 %v718
        %v746 = vpop.xlane.xlu0 %745
        %747 = vadd.xlane.f32.xlu0 %v719
        %v748 = vpop.xlane.xlu0 %747
        %749 = vadd.xlane.f32.xlu0 %v720
        %v750 = vpop.xlane.xlu0 %749
        %751 = vadd.xlane.f32.xlu0 %v721
        %v752 = vpop.xlane.xlu0 %751
        %753 = vadd.xlane.f32.xlu0 %v722
        %v754 = vpop.xlane.xlu0 %753
        %v755 = vrcp.pop 128.0
        %v756 = vmul.f32 %v724, %v755
        %v757 = vmul.f32 %v726, %v755
        %v758 = vmul.f32 %v728, %v755
        %v759 = vmul.f32 %v730, %v755
        %v760 = vmul.f32 %v732, %v755
        %v761 = vmul.f32 %v734, %v755
        %v762 = vmul.f32 %v736, %v755
        %v763 = vmul.f32 %v738, %v755
        %v764 = vmul.f32 %v740, %v755
        %v765 = vmul.f32 %v742, %v755
        %v766 = vmul.f32 %v744, %v755
        %v767 = vmul.f32 %v746, %v755
        %v768 = vmul.f32 %v748, %v755
        %v769 = vmul.f32 %v750, %v755
        %v770 = vmul.f32 %v752, %v755
        %v771 = vmul.f32 %v754, %v755
        %v772 = vsub.f32 %v707, %v756
        %v773 = vsub.f32 %v708, %v757
        %v774 = vsub.f32 %v709, %v758
        %v775 = vsub.f32 %v710, %v759
        %v776 = vsub.f32 %v711, %v760
        %v777 = vsub.f32 %v712, %v761
        %v778 = vsub.f32 %v713, %v762
        %v779 = vsub.f32 %v714, %v763
        %v780 = vsub.f32 %v715, %v764
        %v781 = vsub.f32 %v716, %v765
        %v782 = vsub.f32 %v717, %v766
        %v783 = vsub.f32 %v718, %v767
        %v784 = vsub.f32 %v719, %v768
        %v785 = vsub.f32 %v720, %v769
        %v786 = vsub.f32 %v721, %v770
        %v787 = vsub.f32 %v722, %v771
        %v788 = vmul.f32 %v772, %v772
        %v789 = vmul.f32 %v773, %v773
        %v790 = vmul.f32 %v774, %v774
        %v791 = vmul.f32 %v775, %v775
        %v792 = vmul.f32 %v776, %v776
        %v793 = vmul.f32 %v777, %v777
        %v794 = vmul.f32 %v778, %v778
        %v795 = vmul.f32 %v779, %v779
        %v796 = vmul.f32 %v780, %v780
        %v797 = vmul.f32 %v781, %v781
        %v798 = vmul.f32 %v782, %v782
        %v799 = vmul.f32 %v783, %v783
        %v800 = vmul.f32 %v784, %v784
        %v801 = vmul.f32 %v785, %v785
        %v802 = vmul.f32 %v786, %v786
        %v803 = vmul.f32 %v787, %v787
        %804 = vadd.xlane.f32.xlu0 %v788
        %v805 = vpop.xlane.xlu0 %804
        %806 = vadd.xlane.f32.xlu0 %v789
        %v807 = vpop.xlane.xlu0 %806
        %808 = vadd.xlane.f32.xlu0 %v790
        %v809 = vpop.xlane.xlu0 %808
        %810 = vadd.xlane.f32.xlu0 %v791
        %v811 = vpop.xlane.xlu0 %810
        %812 = vadd.xlane.f32.xlu0 %v792
        %v813 = vpop.xlane.xlu0 %812
        %814 = vadd.xlane.f32.xlu0 %v793
        %v815 = vpop.xlane.xlu0 %814
        %816 = vadd.xlane.f32.xlu0 %v794
        %v817 = vpop.xlane.xlu0 %816
        %818 = vadd.xlane.f32.xlu0 %v795
        %v819 = vpop.xlane.xlu0 %818
        %820 = vadd.xlane.f32.xlu0 %v796
        %v821 = vpop.xlane.xlu0 %820
        %822 = vadd.xlane.f32.xlu0 %v797
        %v823 = vpop.xlane.xlu0 %822
        %824 = vadd.xlane.f32.xlu0 %v798
        %v825 = vpop.xlane.xlu0 %824
        %826 = vadd.xlane.f32.xlu0 %v799
        %v827 = vpop.xlane.xlu0 %826
        %828 = vadd.xlane.f32.xlu0 %v800
        %v829 = vpop.xlane.xlu0 %828
        %830 = vadd.xlane.f32.xlu0 %v801
        %v831 = vpop.xlane.xlu0 %830
        %832 = vadd.xlane.f32.xlu0 %v802
        %v833 = vpop.xlane.xlu0 %832
        %834 = vadd.xlane.f32.xlu0 %v803
        %v835 = vpop.xlane.xlu0 %834
        %v836 = vmul.f32 %v805, %v755
        %v837 = vmul.f32 %v807, %v755
        %v838 = vmul.f32 %v809, %v755
        %v839 = vmul.f32 %v811, %v755
        %v840 = vmul.f32 %v813, %v755
        %v841 = vmul.f32 %v815, %v755
        %v842 = vmul.f32 %v817, %v755
        %v843 = vmul.f32 %v819, %v755
        %v844 = vmul.f32 %v821, %v755
        %v845 = vmul.f32 %v823, %v755
        %v846 = vmul.f32 %v825, %v755
        %v847 = vmul.f32 %v827, %v755
        %v848 = vmul.f32 %v829, %v755
        %v849 = vmul.f32 %v831, %v755
        %v850 = vmul.f32 %v833, %v755
        %v851 = vmul.f32 %v835, %v755
        %v852 = vadd.f32 %v836, 1e-12
        %v853 = vadd.f32 %v837, 1e-12
        %v854 = vadd.f32 %v838, 1e-12
        %v855 = vadd.f32 %v839, 1e-12
        %v856 = vadd.f32 %v840, 1e-12
        %v857 = vadd.f32 %v841, 1e-12
        %v858 = vadd.f32 %v842, 1e-12
        %v859 = vadd.f32 %v843, 1e-12
        %v860 = vadd.f32 %v844, 1e-12
        %v861 = vadd.f32 %v845, 1e-12
        %v862 = vadd.f32 %v846, 1e-12
        %v863 = vadd.f32 %v847, 1e-12
        %v864 = vadd.f32 %v848, 1e-12
        %v865 = vadd.f32 %v849, 1e-12
        %v866 = vadd.f32 %v850, 1e-12
        %v867 = vadd.f32 %v851, 1e-12
        %v868 = vrsqrt.pop %v852
        %v869 = vrsqrt.pop %v853
        %v870 = vrsqrt.pop %v854
        %v871 = vrsqrt.pop %v855
        %v872 = vrsqrt.pop %v856
        %v873 = vrsqrt.pop %v857
        %v874 = vrsqrt.pop %v858
        %v875 = vrsqrt.pop %v859
        %v876 = vrsqrt.pop %v860
        %v877 = vrsqrt.pop %v861
        %v878 = vrsqrt.pop %v862
        %v879 = vrsqrt.pop %v863
        %v880 = vrsqrt.pop %v864
        %v881 = vrsqrt.pop %v865
        %v882 = vrsqrt.pop %v866
        %v883 = vrsqrt.pop %v867
        %v884 = vmul.f32 %v772, %v868
        %v885 = vmul.f32 %v773, %v869
        %v886 = vmul.f32 %v774, %v870
        %v887 = vmul.f32 %v775, %v871
        %v888 = vmul.f32 %v776, %v872
        %v889 = vmul.f32 %v777, %v873
        %v890 = vmul.f32 %v778, %v874
        %v891 = vmul.f32 %v779, %v875
        %v892 = vmul.f32 %v780, %v876
        %v893 = vmul.f32 %v781, %v877
        %v894 = vmul.f32 %v782, %v878
        %v895 = vmul.f32 %v783, %v879
        %v896 = vmul.f32 %v784, %v880
        %v897 = vmul.f32 %v785, %v881
        %v898 = vmul.f32 %v786, %v882
        %v899 = vmul.f32 %v787, %v883
        %v900 = vlaneseq
        %v901 = vshrl.u32 %v900, 7
        %v902 = vsub.s32 0, %v901
        %v903 = vrot.slane %v489, %v902
        %v904 = vmul.f32 %v884, %v903
        %v905 = vmul.f32 %v885, %v903
        %v906 = vmul.f32 %v886, %v903
        %v907 = vmul.f32 %v887, %v903
        %v908 = vmul.f32 %v888, %v903
        %v909 = vmul.f32 %v889, %v903
        %v910 = vmul.f32 %v890, %v903
        %v911 = vmul.f32 %v891, %v903
        %v912 = vmul.f32 %v892, %v903
        %v913 = vmul.f32 %v893, %v903
        %v914 = vmul.f32 %v894, %v903
        %v915 = vmul.f32 %v895, %v903
        %v916 = vmul.f32 %v896, %v903
        %v917 = vmul.f32 %v897, %v903
        %v918 = vmul.f32 %v898, %v903
        %v919 = vmul.f32 %v899, %v903
        %v920 = vlaneseq
        %v921 = vshrl.u32 %v920, 7
        %v922 = vsub.s32 0, %v921
        %v923 = vrot.slane %v490, %v922
        %v924 = vadd.f32 %v904, %v923
        %v925 = vadd.f32 %v905, %v923
        %v926 = vadd.f32 %v906, %v923
        %v927 = vadd.f32 %v907, %v923
        %v928 = vadd.f32 %v908, %v923
        %v929 = vadd.f32 %v909, %v923
        %v930 = vadd.f32 %v910, %v923
        %v931 = vadd.f32 %v911, %v923
        %v932 = vadd.f32 %v912, %v923
        %v933 = vadd.f32 %v913, %v923
        %v934 = vadd.f32 %v914, %v923
        %v935 = vadd.f32 %v915, %v923
        %v936 = vadd.f32 %v916, %v923
        %v937 = vadd.f32 %v917, %v923
        %v938 = vadd.f32 %v918, %v923
        %v939 = vadd.f32 %v919, %v923
        %v940 = vlaneseq
        %v941 = vshrl.u32 %v940, 7
        %v942 = vsub.s32 0, %v941
        %v943 = vrot.slane %v491, %v942
        %944 = vmatprep.subr.mxu0 0.0
        %945 = vmatpush1.msra.mxu0 %v455
        %946 = vmatprep.subr.mxu0 0.0
        %947 = vmatpush1.msra.mxu0 %v454
        %948 = vmatprep.subr.mxu0 0.0
        %949 = vmatpush1.msra.mxu0 %v453
        %950 = vmatprep.subr.mxu0 0.0
        %951 = vmatpush1.msra.mxu0 %v452
        %952 = vmatprep.subr.mxu0 0.0
        %953 = vmatpush1.msra.mxu0 %v451
        %954 = vmatprep.subr.mxu0 0.0
        %955 = vmatpush1.msra.mxu0 %v450
        %956 = vmatprep.subr.mxu0 0.0
        %957 = vmatpush1.msra.mxu0 %v449
        %958 = vmatprep.subr.mxu0 0.0
        %959 = vmatpush1.msra.mxu0 %v448
        %960 = vmatprep.subr.mxu0 0.0
        %961 = vmatpush1.msra.mxu0 %v447
        %962 = vmatprep.subr.mxu0 0.0
        %963 = vmatpush1.msra.mxu0 %v446
        %964 = vmatprep.subr.mxu0 0.0
        %965 = vmatpush1.msra.mxu0 %v445
        %966 = vmatprep.subr.mxu0 0.0
        %967 = vmatpush1.msra.mxu0 %v444
        %968 = vmatprep.subr.mxu0 0.0
        %969 = vmatpush1.msra.mxu0 %v443
        %970 = vmatprep.subr.mxu0 0.0
        %971 = vmatpush1.msra.mxu0 %v442
        %972 = vmatprep.subr.mxu0 0.0
        %973 = vmatpush1.msra.mxu0 %v441
        %974 = vmatprep.subr.mxu0 0.0
        %975 = vmatpush1.msra.mxu0 %v440
        %976 = vmatprep.subr.mxu0 0.0
        %977 = vmatpush2.msra.mxu0 0.0
        %978 = vmatprep.subr.mxu0 0.0
        %979 = vmatpush2.msra.mxu0 0.0
        %980 = vmatprep.subr.mxu0 0.0
        %981 = vmatpush2.msra.mxu0 0.0
        %982 = vmatprep.subr.mxu0 0.0
        %983 = vmatpush2.msra.mxu0 0.0
        %984 = vmatprep.subr.mxu0 0.0
        %985 = vmatpush2.msra.mxu0 0.0
        %986 = vmatprep.subr.mxu0 0.0
        %987 = vmatpush2.msra.mxu0 0.0
        %988 = vmatprep.subr.mxu0 0.0
        %989 = vmatpush2.msra.mxu0 0.0
        %990 = vmatprep.subr.mxu0 0.0
        %991 = vmatpush2.msra.mxu0 0.0
        %992 = vmatprep.subr.mxu0 0.0
        %993 = vmatpush2.msra.mxu0 0.0
        %994 = vmatprep.subr.mxu0 0.0
        %995 = vmatpush2.msra.mxu0 0.0
        %996 = vmatprep.subr.mxu0 0.0
        %997 = vmatpush2.msra.mxu0 0.0
        %998 = vmatprep.subr.mxu0 0.0
        %999 = vmatpush2.msra.mxu0 0.0
        %1000 = vmatprep.subr.mxu0 0.0
        %1001 = vmatpush2.msra.mxu0 0.0
        %1002 = vmatprep.subr.mxu0 0.0
        %1003 = vmatpush2.msra.mxu0 0.0
        %1004 = vmatprep.subr.mxu0 0.0
        %1005 = vmatpush2.msra.mxu0 0.0
        %1006 = vmatprep.subr.mxu0 0.0
        %1007 = vmatpush2.msra.mxu0 0.0
        %1008 = vmatprep.mubr.f32.mxu0 0.0
        %1009 = vmatmul.mubr.f32.gmra.mxu0 %v924
        %v1010 = vpop.f32.mrf.mxu0
        %v1011 = vadd.f32 %v943, %v1010
        %v1012 = vpop.f32.mrf.mxu0
        %1013 = vmatprep.mubr.f32.mxu0 0.0
        %1014 = vmatmul.mubr.f32.gmra.mxu0 %v925
        %v1015 = vpop.f32.mrf.mxu0
        %v1016 = vadd.f32 %v943, %v1015
        %v1017 = vpop.f32.mrf.mxu0
        %1018 = vmatprep.mubr.f32.mxu0 0.0
        %1019 = vmatmul.mubr.f32.gmra.mxu0 %v926
        %v1020 = vpop.f32.mrf.mxu0
        %v1021 = vadd.f32 %v943, %v1020
        %v1022 = vpop.f32.mrf.mxu0
        %1023 = vmatprep.mubr.f32.mxu0 0.0
        %1024 = vmatmul.mubr.f32.gmra.mxu0 %v927
        %v1025 = vpop.f32.mrf.mxu0
        %v1026 = vadd.f32 %v943, %v1025
        %v1027 = vpop.f32.mrf.mxu0
        %1028 = vmatprep.mubr.f32.mxu0 0.0
        %1029 = vmatmul.mubr.f32.gmra.mxu0 %v928
        %v1030 = vpop.f32.mrf.mxu0
        %v1031 = vadd.f32 %v943, %v1030
        %v1032 = vpop.f32.mrf.mxu0
        %1033 = vmatprep.mubr.f32.mxu0 0.0
        %1034 = vmatmul.mubr.f32.gmra.mxu0 %v929
        %v1035 = vpop.f32.mrf.mxu0
        %v1036 = vadd.f32 %v943, %v1035
        %v1037 = vpop.f32.mrf.mxu0
        %1038 = vmatprep.mubr.f32.mxu0 0.0
        %1039 = vmatmul.mubr.f32.gmra.mxu0 %v930
        %v1040 = vpop.f32.mrf.mxu0
        %v1041 = vadd.f32 %v943, %v1040
        %v1042 = vpop.f32.mrf.mxu0
        %1043 = vmatprep.mubr.f32.mxu0 0.0
        %1044 = vmatmul.mubr.f32.gmra.mxu0 %v931
        %v1045 = vpop.f32.mrf.mxu0
        %v1046 = vadd.f32 %v943, %v1045
        %v1047 = vpop.f32.mrf.mxu0
        %1048 = vmatprep.mubr.f32.mxu0 0.0
        %1049 = vmatmul.mubr.f32.gmra.mxu0 %v932
        %v1050 = vpop.f32.mrf.mxu0
        %v1051 = vadd.f32 %v943, %v1050
        %v1052 = vpop.f32.mrf.mxu0
        %1053 = vmatprep.mubr.f32.mxu0 0.0
        %1054 = vmatmul.mubr.f32.gmra.mxu0 %v933
        %v1055 = vpop.f32.mrf.mxu0
        %v1056 = vadd.f32 %v943, %v1055
        %v1057 = vpop.f32.mrf.mxu0
        %1058 = vmatprep.mubr.f32.mxu0 0.0
        %1059 = vmatmul.mubr.f32.gmra.mxu0 %v934
        %v1060 = vpop.f32.mrf.mxu0
        %v1061 = vadd.f32 %v943, %v1060
        %v1062 = vpop.f32.mrf.mxu0
        %1063 = vmatprep.mubr.f32.mxu0 0.0
        %1064 = vmatmul.mubr.f32.gmra.mxu0 %v935
        %v1065 = vpop.f32.mrf.mxu0
        %v1066 = vadd.f32 %v943, %v1065
        %v1067 = vpop.f32.mrf.mxu0
        %1068 = vmatprep.mubr.f32.mxu0 0.0
        %1069 = vmatmul.mubr.f32.gmra.mxu0 %v936
        %v1070 = vpop.f32.mrf.mxu0
        %v1071 = vadd.f32 %v943, %v1070
        %v1072 = vpop.f32.mrf.mxu0
        %1073 = vmatprep.mubr.f32.mxu0 0.0
        %1074 = vmatmul.mubr.f32.gmra.mxu0 %v937
        %v1075 = vpop.f32.mrf.mxu0
        %v1076 = vadd.f32 %v943, %v1075
        %v1077 = vpop.f32.mrf.mxu0
        %1078 = vmatprep.mubr.f32.mxu0 0.0
        %1079 = vmatmul.mubr.f32.gmra.mxu0 %v938
        %v1080 = vpop.f32.mrf.mxu0
        %v1081 = vadd.f32 %v943, %v1080
        %v1082 = vpop.f32.mrf.mxu0
        %1083 = vmatprep.mubr.f32.mxu0 0.0
        %1084 = vmatmul.mubr.f32.gmra.mxu0 %v939
        %v1085 = vpop.f32.mrf.mxu0
        %v1086 = vadd.f32 %v943, %v1085
        %v1087 = vpop.f32.mrf.mxu0
        %1088 = vdwg.mxu0
        %v1089 = vld [vmem:[%s394] sm:$0x1]
        %v1090 = vmul.f32 %v1011, %v1011
        %v1091 = vmul.f32 %v1016, %v1016
        %v1092 = vmul.f32 %v1021, %v1021
        %v1093 = vmul.f32 %v1026, %v1026
        %v1094 = vmul.f32 %v1031, %v1031
        %v1095 = vmul.f32 %v1036, %v1036
        %v1096 = vmul.f32 %v1041, %v1041
        %v1097 = vmul.f32 %v1046, %v1046
        %v1098 = vmul.f32 %v1051, %v1051
        %v1099 = vmul.f32 %v1056, %v1056
        %v1100 = vmul.f32 %v1061, %v1061
        %v1101 = vmul.f32 %v1066, %v1066
        %v1102 = vmul.f32 %v1071, %v1071
        %v1103 = vmul.f32 %v1076, %v1076
        %v1104 = vmul.f32 %v1081, %v1081
        %v1105 = vmul.f32 %v1086, %v1086
        %1106 = vadd.xlane.f32.xlu0 %v1090
        %v1107 = vpop.xlane.xlu0 %1106
        %1108 = vadd.xlane.f32.xlu0 %v1091
        %v1109 = vpop.xlane.xlu0 %1108
        %1110 = vadd.xlane.f32.xlu0 %v1092
        %v1111 = vpop.xlane.xlu0 %1110
        %1112 = vadd.xlane.f32.xlu0 %v1093
        %v1113 = vpop.xlane.xlu0 %1112
        %1114 = vadd.xlane.f32.xlu0 %v1094
        %v1115 = vpop.xlane.xlu0 %1114
        %1116 = vadd.xlane.f32.xlu0 %v1095
        %v1117 = vpop.xlane.xlu0 %1116
        %1118 = vadd.xlane.f32.xlu0 %v1096
        %v1119 = vpop.xlane.xlu0 %1118
        %1120 = vadd.xlane.f32.xlu0 %v1097
        %v1121 = vpop.xlane.xlu0 %1120
        %1122 = vadd.xlane.f32.xlu0 %v1098
        %v1123 = vpop.xlane.xlu0 %1122
        %1124 = vadd.xlane.f32.xlu0 %v1099
        %v1125 = vpop.xlane.xlu0 %1124
        %1126 = vadd.xlane.f32.xlu0 %v1100
        %v1127 = vpop.xlane.xlu0 %1126
        %1128 = vadd.xlane.f32.xlu0 %v1101
        %v1129 = vpop.xlane.xlu0 %1128
        %1130 = vadd.xlane.f32.xlu0 %v1102
        %v1131 = vpop.xlane.xlu0 %1130
        %1132 = vadd.xlane.f32.xlu0 %v1103
        %v1133 = vpop.xlane.xlu0 %1132
        %1134 = vadd.xlane.f32.xlu0 %v1104
        %v1135 = vpop.xlane.xlu0 %1134
        %1136 = vadd.xlane.f32.xlu0 %v1105
        %v1137 = vpop.xlane.xlu0 %1136
        %v1138 = vmax.f32 %v1107, 1e-24
        %v1139 = vmax.f32 %v1109, 1e-24
        %v1140 = vmax.f32 %v1111, 1e-24
        %v1141 = vmax.f32 %v1113, 1e-24
        %v1142 = vmax.f32 %v1115, 1e-24
        %v1143 = vmax.f32 %v1117, 1e-24
        %v1144 = vmax.f32 %v1119, 1e-24
        %v1145 = vmax.f32 %v1121, 1e-24
        %v1146 = vmax.f32 %v1123, 1e-24
        %v1147 = vmax.f32 %v1125, 1e-24
        %v1148 = vmax.f32 %v1127, 1e-24
        %v1149 = vmax.f32 %v1129, 1e-24
        %v1150 = vmax.f32 %v1131, 1e-24
        %v1151 = vmax.f32 %v1133, 1e-24
        %v1152 = vmax.f32 %v1135, 1e-24
        %v1153 = vmax.f32 %v1137, 1e-24
        %v1154 = vrsqrt.pop %v1138
        %v1155 = vrsqrt.pop %v1139
        %v1156 = vrsqrt.pop %v1140
        %v1157 = vrsqrt.pop %v1141
        %v1158 = vrsqrt.pop %v1142
        %v1159 = vrsqrt.pop %v1143
        %v1160 = vrsqrt.pop %v1144
        %v1161 = vrsqrt.pop %v1145
        %v1162 = vrsqrt.pop %v1146
        %v1163 = vrsqrt.pop %v1147
        %v1164 = vrsqrt.pop %v1148
        %v1165 = vrsqrt.pop %v1149
        %v1166 = vrsqrt.pop %v1150
        %v1167 = vrsqrt.pop %v1151
        %v1168 = vrsqrt.pop %v1152
        %v1169 = vrsqrt.pop %v1153
        %v1170 = vmul.f32 %v1011, %v1154
        %v1171 = vmul.f32 %v1016, %v1155
        %v1172 = vmul.f32 %v1021, %v1156
        %v1173 = vmul.f32 %v1026, %v1157
        %v1174 = vmul.f32 %v1031, %v1158
        %v1175 = vmul.f32 %v1036, %v1159
        %v1176 = vmul.f32 %v1041, %v1160
        %v1177 = vmul.f32 %v1046, %v1161
        %v1178 = vmul.f32 %v1051, %v1162
        %v1179 = vmul.f32 %v1056, %v1163
        %v1180 = vmul.f32 %v1061, %v1164
        %v1181 = vmul.f32 %v1066, %v1165
        %v1182 = vmul.f32 %v1071, %v1166
        %v1183 = vmul.f32 %v1076, %v1167
        %v1184 = vmul.f32 %v1081, %v1168
        %v1185 = vmul.f32 %v1086, %v1169
        %v1186 = vmul.f32 %v1089, %v1089
        %vm1187 = vcmask 1040384
        %v1188 = vsel %vm1187, %v1186, 0.0
        %1189 = vadd.xlane.f32.xlu0 %v1188
        %v1190 = vpop.xlane.xlu0 %1189
        %v1191 = vmax.f32 %v1190, 1e-24
        %v1192 = vrsqrt.pop %v1191
        %v1193 = vmul.f32 %v1089, %v1192
        %v1195 = vlaneseq
        %v1196 = vshrl.u32 %v1195, 7
        %v1197 = vsub.s32 0, %v1196
        %v1198 = vrot.slane %v1193, %v1197
        %v1200 = vmul.f32 %v1170, %v1198
        %v1201 = vmul.f32 %v1171, %v1198
        %v1202 = vmul.f32 %v1172, %v1198
        %v1203 = vmul.f32 %v1173, %v1198
        %v1204 = vmul.f32 %v1174, %v1198
        %v1205 = vmul.f32 %v1175, %v1198
        %v1206 = vmul.f32 %v1176, %v1198
        %v1207 = vmul.f32 %v1177, %v1198
        %v1208 = vmul.f32 %v1178, %v1198
        %v1209 = vmul.f32 %v1179, %v1198
        %v1210 = vmul.f32 %v1180, %v1198
        %v1211 = vmul.f32 %v1181, %v1198
        %v1212 = vmul.f32 %v1182, %v1198
        %v1213 = vmul.f32 %v1183, %v1198
        %v1214 = vmul.f32 %v1184, %v1198
        %v1215 = vmul.f32 %v1185, %v1198
        %1216 = vadd.xlane.f32.xlu0 %v1200
        %v1217 = vpop.xlane.xlu0 %1216
        %1218 = vadd.xlane.f32.xlu0 %v1201
        %v1219 = vpop.xlane.xlu0 %1218
        %1220 = vadd.xlane.f32.xlu0 %v1202
        %v1221 = vpop.xlane.xlu0 %1220
        %1222 = vadd.xlane.f32.xlu0 %v1203
        %v1223 = vpop.xlane.xlu0 %1222
        %1224 = vadd.xlane.f32.xlu0 %v1204
        %v1225 = vpop.xlane.xlu0 %1224
        %1226 = vadd.xlane.f32.xlu0 %v1205
        %v1227 = vpop.xlane.xlu0 %1226
        %1228 = vadd.xlane.f32.xlu0 %v1206
        %v1229 = vpop.xlane.xlu0 %1228
        %1230 = vadd.xlane.f32.xlu0 %v1207
        %v1231 = vpop.xlane.xlu0 %1230
        %1232 = vadd.xlane.f32.xlu0 %v1208
        %v1233 = vpop.xlane.xlu0 %1232
        %1234 = vadd.xlane.f32.xlu0 %v1209
        %v1235 = vpop.xlane.xlu0 %1234
        %1236 = vadd.xlane.f32.xlu0 %v1210
        %v1237 = vpop.xlane.xlu0 %1236
        %1238 = vadd.xlane.f32.xlu0 %v1211
        %v1239 = vpop.xlane.xlu0 %1238
        %1240 = vadd.xlane.f32.xlu0 %v1212
        %v1241 = vpop.xlane.xlu0 %1240
        %1242 = vadd.xlane.f32.xlu0 %v1213
        %v1243 = vpop.xlane.xlu0 %1242
        %1244 = vadd.xlane.f32.xlu0 %v1214
        %v1245 = vpop.xlane.xlu0 %1244
        %1246 = vadd.xlane.f32.xlu0 %v1215
        %v1247 = vpop.xlane.xlu0 %1246
        %v1248 = vmul.f32 %v1217, 10.0
        %v1249 = vmul.f32 %v1219, 10.0
        %v1250 = vmul.f32 %v1221, 10.0
        %v1251 = vmul.f32 %v1223, 10.0
        %v1252 = vmul.f32 %v1225, 10.0
        %v1253 = vmul.f32 %v1227, 10.0
        %v1254 = vmul.f32 %v1229, 10.0
        %v1255 = vmul.f32 %v1231, 10.0
        %v1256 = vmul.f32 %v1233, 10.0
        %v1257 = vmul.f32 %v1235, 10.0
        %v1258 = vmul.f32 %v1237, 10.0
        %v1259 = vmul.f32 %v1239, 10.0
        %v1260 = vmul.f32 %v1241, 10.0
        %v1261 = vmul.f32 %v1243, 10.0
        %v1262 = vmul.f32 %v1245, 10.0
        %v1263 = vmul.f32 %v1247, 10.0
        %v1264 = vmax.f32 %v1248, %v1252
        %v1265 = vmax.f32 %v1249, %v1253
        %v1266 = vmax.f32 %v1250, %v1254
        %v1267 = vmax.f32 %v1251, %v1255
        %v1268 = vmax.f32 %v1264, %v1256
        %v1269 = vmax.f32 %v1265, %v1257
        %v1270 = vmax.f32 %v1266, %v1258
        %v1271 = vmax.f32 %v1267, %v1259
        %v1272 = vmax.f32 %v1268, %v1260
        %v1273 = vmax.f32 %v1269, %v1261
        %v1274 = vmax.f32 %v1270, %v1262
        %v1275 = vmax.f32 %v1271, %v1263
        %v1276 = vmax.f32 %v1272, %v1273
        %v1277 = vmax.f32 %v1274, %v1275
        %v1278 = vmax.f32 %v1276, %v1277
        %v1279 = vrot.slane %v1278, 4
        %v1280 = vmax.f32 %v1278, %v1279
        %v1281 = vrot.slane %v1280, 2
        %v1282 = vmax.f32 %v1280, %v1281
        %v1283 = vrot.slane %v1282, 1
        %v1284 = vmax.f32 %v1282, %v1283
        %v1285 = vsub.f32 %v1248, %v1284
        %v1286 = vsub.f32 %v1249, %v1284
        %v1287 = vsub.f32 %v1250, %v1284
        %v1288 = vsub.f32 %v1251, %v1284
        %v1289 = vsub.f32 %v1252, %v1284
        %v1290 = vsub.f32 %v1253, %v1284
        %v1291 = vsub.f32 %v1254, %v1284
        %v1292 = vsub.f32 %v1255, %v1284
        %v1293 = vsub.f32 %v1256, %v1284
        %v1294 = vsub.f32 %v1257, %v1284
        %v1295 = vsub.f32 %v1258, %v1284
        %v1296 = vsub.f32 %v1259, %v1284
        %v1297 = vsub.f32 %v1260, %v1284
        %v1298 = vsub.f32 %v1261, %v1284
        %v1299 = vsub.f32 %v1262, %v1284
        %v1300 = vsub.f32 %v1263, %v1284
        %v1301 = vmul.f32 %v1285, 1.442695
        %v1302 = vpow.pop %v1301
        %v1303 = vmul.f32 %v1286, 1.442695
        %v1304 = vpow.pop %v1303
        %v1305 = vmul.f32 %v1287, 1.442695
        %v1306 = vpow.pop %v1305
        %v1307 = vmul.f32 %v1288, 1.442695
        %v1308 = vpow.pop %v1307
        %v1309 = vmul.f32 %v1289, 1.442695
        %v1310 = vpow.pop %v1309
        %v1311 = vmul.f32 %v1290, 1.442695
        %v1312 = vpow.pop %v1311
        %v1313 = vmul.f32 %v1291, 1.442695
        %v1314 = vpow.pop %v1313
        %v1315 = vmul.f32 %v1292, 1.442695
        %v1316 = vpow.pop %v1315
        %v1317 = vmul.f32 %v1293, 1.442695
        %v1318 = vpow.pop %v1317
        %v1319 = vmul.f32 %v1294, 1.442695
        %v1320 = vpow.pop %v1319
        %v1321 = vmul.f32 %v1295, 1.442695
        %v1322 = vpow.pop %v1321
        %v1323 = vmul.f32 %v1296, 1.442695
        %v1324 = vpow.pop %v1323
        %v1325 = vmul.f32 %v1297, 1.442695
        %v1326 = vpow.pop %v1325
        %v1327 = vmul.f32 %v1298, 1.442695
        %v1328 = vpow.pop %v1327
        %v1329 = vmul.f32 %v1299, 1.442695
        %v1330 = vpow.pop %v1329
        %v1331 = vmul.f32 %v1300, 1.442695
        %v1332 = vpow.pop %v1331
        %v1333 = vadd.f32 %v1302, %v1304
        %v1334 = vadd.f32 %v1333, %v1306
        %v1335 = vadd.f32 %v1334, %v1308
        %v1336 = vadd.f32 %v1335, %v1310
        %v1337 = vadd.f32 %v1336, %v1312
        %v1338 = vadd.f32 %v1337, %v1314
        %v1339 = vadd.f32 %v1338, %v1316
        %v1340 = vadd.f32 %v1339, %v1318
        %v1341 = vadd.f32 %v1340, %v1320
        %v1342 = vadd.f32 %v1341, %v1322
        %v1343 = vadd.f32 %v1342, %v1324
        %v1344 = vadd.f32 %v1343, %v1326
        %v1345 = vadd.f32 %v1344, %v1328
        %v1346 = vadd.f32 %v1345, %v1330
        %v1347 = vadd.f32 %v1346, %v1332
        %v1348 = vrot.slane %v1347, 4
        %v1349 = vadd.f32 %v1347, %v1348
        %v1350 = vrot.slane %v1349, 2
        %v1351 = vadd.f32 %v1349, %v1350
        %v1352 = vrot.slane %v1351, 1
        %v1353 = vadd.f32 %v1351, %v1352
        %v1354 = vrcp.pop %v1353
        %v1355 = vmul.f32 %v1302, %v1354
        %v1356 = vmul.f32 %v1304, %v1354
        %v1357 = vmul.f32 %v1306, %v1354
        %v1358 = vmul.f32 %v1308, %v1354
        %v1359 = vmul.f32 %v1310, %v1354
        %v1360 = vmul.f32 %v1312, %v1354
        %v1361 = vmul.f32 %v1314, %v1354
        %v1362 = vmul.f32 %v1316, %v1354
        %v1363 = vmul.f32 %v1318, %v1354
        %v1364 = vmul.f32 %v1320, %v1354
        %v1365 = vmul.f32 %v1322, %v1354
        %v1366 = vmul.f32 %v1324, %v1354
        %v1367 = vmul.f32 %v1326, %v1354
        %v1368 = vmul.f32 %v1328, %v1354
        %v1369 = vmul.f32 %v1330, %v1354
        %v1370 = vmul.f32 %v1332, %v1354
        %vm1371 = vcmask 7168
        %1372 = vst.msk [vmem:[%s407] sm:$0xff] %vm1371, %v1355
        %1373 = vst.msk [vmem:[%s407 + $0x8] sm:$0xff] %vm1371, %v1356
        %1374 = vst.msk [vmem:[%s407 + $0x10] sm:$0xff] %vm1371, %v1357
        %1375 = vst.msk [vmem:[%s407 + $0x18] sm:$0xff] %vm1371, %v1358
        %1376 = vst.msk [vmem:[%s407 + $0x20] sm:$0xff] %vm1371, %v1359
        %1377 = vst.msk [vmem:[%s407 + $0x28] sm:$0xff] %vm1371, %v1360
        %1378 = vst.msk [vmem:[%s407 + $0x30] sm:$0xff] %vm1371, %v1361
        %1379 = vst.msk [vmem:[%s407 + $0x38] sm:$0xff] %vm1371, %v1362
        %1380 = vst.msk [vmem:[%s407 + $0x40] sm:$0xff] %vm1371, %v1363
        %1381 = vst.msk [vmem:[%s407 + $0x48] sm:$0xff] %vm1371, %v1364
        %1382 = vst.msk [vmem:[%s407 + $0x50] sm:$0xff] %vm1371, %v1365
        %1383 = vst.msk [vmem:[%s407 + $0x58] sm:$0xff] %vm1371, %v1366
        %1384 = vst.msk [vmem:[%s407 + $0x60] sm:$0xff] %vm1371, %v1367
        %1385 = vst.msk [vmem:[%s407 + $0x68] sm:$0xff] %vm1371, %v1368
        %1386 = vst.msk [vmem:[%s407 + $0x70] sm:$0xff] %vm1371, %v1369
        %1387 = vst.msk [vmem:[%s407 + $0x78] sm:$0xff] %vm1371, %v1370
        %v1388 = vld [vmem:[%s399] sm:$0xff]
        %v1389 = vld [vmem:[%s399 + $0x8] sm:$0xff]
        %v1390 = vld [vmem:[%s399 + $0x10] sm:$0xff]
        %v1391 = vld [vmem:[%s399 + $0x18] sm:$0xff]
        %v1392 = vld [vmem:[%s399 + $0x20] sm:$0xff]
        %v1393 = vld [vmem:[%s399 + $0x28] sm:$0xff]
        %v1394 = vld [vmem:[%s399 + $0x30] sm:$0xff]
        %v1395 = vld [vmem:[%s399 + $0x38] sm:$0xff]
        %v1396 = vld [vmem:[%s399 + $0x40] sm:$0xff]
        %v1397 = vld [vmem:[%s399 + $0x48] sm:$0xff]
        %v1398 = vld [vmem:[%s399 + $0x50] sm:$0xff]
        %v1399 = vld [vmem:[%s399 + $0x58] sm:$0xff]
        %v1400 = vld [vmem:[%s399 + $0x60] sm:$0xff]
        %v1401 = vld [vmem:[%s399 + $0x68] sm:$0xff]
        %v1402 = vld [vmem:[%s399 + $0x70] sm:$0xff]
        %v1403 = vld [vmem:[%s399 + $0x78] sm:$0xff]
        %v1404 = vmul.f32 %v1388, %v1355
        %v1405 = vmul.f32 %v1389, %v1356
        %v1406 = vmul.f32 %v1390, %v1357
        %v1407 = vmul.f32 %v1391, %v1358
        %v1408 = vmul.f32 %v1392, %v1359
        %v1409 = vmul.f32 %v1393, %v1360
        %v1410 = vmul.f32 %v1394, %v1361
        %v1411 = vmul.f32 %v1395, %v1362
        %v1412 = vmul.f32 %v1396, %v1363
        %v1413 = vmul.f32 %v1397, %v1364
        %v1414 = vmul.f32 %v1398, %v1365
        %v1415 = vmul.f32 %v1399, %v1366
        %v1416 = vmul.f32 %v1400, %v1367
        %v1417 = vmul.f32 %v1401, %v1368
        %v1418 = vmul.f32 %v1402, %v1369
        %v1419 = vmul.f32 %v1403, %v1370
        %vm1420 = vcmask 23552
        %v1421 = vsel %vm1420, %v1404, 0.0
        %v1422 = vsel %vm1420, %v1405, 0.0
        %v1423 = vadd.f32 %v1421, %v1422
        %v1424 = vsel %vm1420, %v1406, 0.0
        %v1425 = vadd.f32 %v1423, %v1424
        %v1426 = vsel %vm1420, %v1407, 0.0
        %v1427 = vadd.f32 %v1425, %v1426
        %v1428 = vsel %vm1420, %v1408, 0.0
        %v1429 = vadd.f32 %v1427, %v1428
        %v1430 = vsel %vm1420, %v1409, 0.0
        %v1431 = vadd.f32 %v1429, %v1430
        %v1432 = vsel %vm1420, %v1410, 0.0
        %v1433 = vadd.f32 %v1431, %v1432
        %v1434 = vsel %vm1420, %v1411, 0.0
        %v1435 = vadd.f32 %v1433, %v1434
        %v1436 = vsel %vm1420, %v1412, 0.0
        %v1437 = vadd.f32 %v1435, %v1436
        %v1438 = vsel %vm1420, %v1413, 0.0
        %v1439 = vadd.f32 %v1437, %v1438
        %v1440 = vsel %vm1420, %v1414, 0.0
        %v1441 = vadd.f32 %v1439, %v1440
        %v1442 = vsel %vm1420, %v1415, 0.0
        %v1443 = vadd.f32 %v1441, %v1442
        %v1444 = vsel %vm1420, %v1416, 0.0
        %v1445 = vadd.f32 %v1443, %v1444
        %v1446 = vsel %vm1420, %v1417, 0.0
        %v1447 = vadd.f32 %v1445, %v1446
        %v1448 = vsel %vm1420, %v1418, 0.0
        %v1449 = vadd.f32 %v1447, %v1448
        %v1450 = vsel %vm1420, %v1419, 0.0
        %v1451 = vadd.f32 %v1449, %v1450
        %v1452 = vrot.slane %v1451, 4
        %v1453 = vadd.f32 %v1451, %v1452
        %v1454 = vrot.slane %v1453, 2
        %v1455 = vadd.f32 %v1453, %v1454
        %v1456 = vrot.slane %v1455, 1
        %v1457 = vadd.f32 %v1455, %v1456
        %1458 = vmatprep.subr.mxu0 0.0
        %1459 = vmatpush1.msra.mxu0 %v471
        %1460 = vmatprep.subr.mxu0 0.0
        %1461 = vmatpush1.msra.mxu0 %v470
        %1462 = vmatprep.subr.mxu0 0.0
        %1463 = vmatpush1.msra.mxu0 %v469
        %1464 = vmatprep.subr.mxu0 0.0
        %1465 = vmatpush1.msra.mxu0 %v468
        %1466 = vmatprep.subr.mxu0 0.0
        %1467 = vmatpush1.msra.mxu0 %v467
        %1468 = vmatprep.subr.mxu0 0.0
        %1469 = vmatpush1.msra.mxu0 %v466
        %1470 = vmatprep.subr.mxu0 0.0
        %1471 = vmatpush1.msra.mxu0 %v465
        %1472 = vmatprep.subr.mxu0 0.0
        %1473 = vmatpush1.msra.mxu0 %v464
        %1474 = vmatprep.subr.mxu0 0.0
        %1475 = vmatpush1.msra.mxu0 %v463
        %1476 = vmatprep.subr.mxu0 0.0
        %1477 = vmatpush1.msra.mxu0 %v462
        %1478 = vmatprep.subr.mxu0 0.0
        %1479 = vmatpush1.msra.mxu0 %v461
        %1480 = vmatprep.subr.mxu0 0.0
        %1481 = vmatpush1.msra.mxu0 %v460
        %1482 = vmatprep.subr.mxu0 0.0
        %1483 = vmatpush1.msra.mxu0 %v459
        %1484 = vmatprep.subr.mxu0 0.0
        %1485 = vmatpush1.msra.mxu0 %v458
        %1486 = vmatprep.subr.mxu0 0.0
        %1487 = vmatpush1.msra.mxu0 %v457
        %1488 = vmatprep.subr.mxu0 0.0
        %1489 = vmatpush1.msra.mxu0 %v456
        %1490 = vmatprep.subr.mxu0 0.0
        %1491 = vmatpush2.msra.mxu0 0.0
        %1492 = vmatprep.subr.mxu0 0.0
        %1493 = vmatpush2.msra.mxu0 0.0
        %1494 = vmatprep.subr.mxu0 0.0
        %1495 = vmatpush2.msra.mxu0 0.0
        %1496 = vmatprep.subr.mxu0 0.0
        %1497 = vmatpush2.msra.mxu0 0.0
        %1498 = vmatprep.subr.mxu0 0.0
        %1499 = vmatpush2.msra.mxu0 0.0
        %1500 = vmatprep.subr.mxu0 0.0
        %1501 = vmatpush2.msra.mxu0 0.0
        %1502 = vmatprep.subr.mxu0 0.0
        %1503 = vmatpush2.msra.mxu0 0.0
        %1504 = vmatprep.subr.mxu0 0.0
        %1505 = vmatpush2.msra.mxu0 0.0
        %1506 = vmatprep.subr.mxu0 0.0
        %1507 = vmatpush2.msra.mxu0 0.0
        %1508 = vmatprep.subr.mxu0 0.0
        %1509 = vmatpush2.msra.mxu0 0.0
        %1510 = vmatprep.subr.mxu0 0.0
        %1511 = vmatpush2.msra.mxu0 0.0
        %1512 = vmatprep.subr.mxu0 0.0
        %1513 = vmatpush2.msra.mxu0 0.0
        %1514 = vmatprep.subr.mxu0 0.0
        %1515 = vmatpush2.msra.mxu0 0.0
        %1516 = vmatprep.subr.mxu0 0.0
        %1517 = vmatpush2.msra.mxu0 0.0
        %1518 = vmatprep.subr.mxu0 0.0
        %1519 = vmatpush2.msra.mxu0 0.0
        %1520 = vmatprep.subr.mxu0 0.0
        %1521 = vmatpush2.msra.mxu0 0.0
        %1522 = vmatprep.mubr.f32.mxu0 0.0
        %1523 = vmatmul.mubr.f32.gmra.mxu0 %v1089
        %v1524 = vpop.f32.mrf.mxu0
        %v1525 = vadd.f32 %v492, %v1524
        %v1526 = vpop.f32.mrf.mxu0
        %1527 = vdwg.mxu0
        %vm1528 = vcmp.ge.f32.partialorder %v1525, 0.0
        %v1529 = vmul.f32 %v1525, 0.02
        %v1530 = vsel %vm1528, %v1525, %v1529
        %1531 = vmatprep.subr.mxu0 0.0
        %1532 = vmatpush1.msra.mxu0 %v487
        %1533 = vmatprep.subr.mxu0 0.0
        %1534 = vmatpush1.msra.mxu0 %v486
        %1535 = vmatprep.subr.mxu0 0.0
        %1536 = vmatpush1.msra.mxu0 %v485
        %1537 = vmatprep.subr.mxu0 0.0
        %1538 = vmatpush1.msra.mxu0 %v484
        %1539 = vmatprep.subr.mxu0 0.0
        %1540 = vmatpush1.msra.mxu0 %v483
        %1541 = vmatprep.subr.mxu0 0.0
        %1542 = vmatpush1.msra.mxu0 %v482
        %1543 = vmatprep.subr.mxu0 0.0
        %1544 = vmatpush1.msra.mxu0 %v481
        %1545 = vmatprep.subr.mxu0 0.0
        %1546 = vmatpush1.msra.mxu0 %v480
        %1547 = vmatprep.subr.mxu0 0.0
        %1548 = vmatpush1.msra.mxu0 %v479
        %1549 = vmatprep.subr.mxu0 0.0
        %1550 = vmatpush1.msra.mxu0 %v478
        %1551 = vmatprep.subr.mxu0 0.0
        %1552 = vmatpush1.msra.mxu0 %v477
        %1553 = vmatprep.subr.mxu0 0.0
        %1554 = vmatpush1.msra.mxu0 %v476
        %1555 = vmatprep.subr.mxu0 0.0
        %1556 = vmatpush1.msra.mxu0 %v475
        %1557 = vmatprep.subr.mxu0 0.0
        %1558 = vmatpush1.msra.mxu0 %v474
        %1559 = vmatprep.subr.mxu0 0.0
        %1560 = vmatpush1.msra.mxu0 %v473
        %1561 = vmatprep.subr.mxu0 0.0
        %1562 = vmatpush1.msra.mxu0 %v472
        %1563 = vmatprep.subr.mxu0 0.0
        %1564 = vmatpush2.msra.mxu0 0.0
        %1565 = vmatprep.subr.mxu0 0.0
        %1566 = vmatpush2.msra.mxu0 0.0
        %1567 = vmatprep.subr.mxu0 0.0
        %1568 = vmatpush2.msra.mxu0 0.0
        %1569 = vmatprep.subr.mxu0 0.0
        %1570 = vmatpush2.msra.mxu0 0.0
        %1571 = vmatprep.subr.mxu0 0.0
        %1572 = vmatpush2.msra.mxu0 0.0
        %1573 = vmatprep.subr.mxu0 0.0
        %1574 = vmatpush2.msra.mxu0 0.0
        %1575 = vmatprep.subr.mxu0 0.0
        %1576 = vmatpush2.msra.mxu0 0.0
        %1577 = vmatprep.subr.mxu0 0.0
        %1578 = vmatpush2.msra.mxu0 0.0
        %1579 = vmatprep.subr.mxu0 0.0
        %1580 = vmatpush2.msra.mxu0 0.0
        %1581 = vmatprep.subr.mxu0 0.0
        %1582 = vmatpush2.msra.mxu0 0.0
        %1583 = vmatprep.subr.mxu0 0.0
        %1584 = vmatpush2.msra.mxu0 0.0
        %1585 = vmatprep.subr.mxu0 0.0
        %1586 = vmatpush2.msra.mxu0 0.0
        %1587 = vmatprep.subr.mxu0 0.0
        %1588 = vmatpush2.msra.mxu0 0.0
        %1589 = vmatprep.subr.mxu0 0.0
        %1590 = vmatpush2.msra.mxu0 0.0
        %1591 = vmatprep.subr.mxu0 0.0
        %1592 = vmatpush2.msra.mxu0 0.0
        %1593 = vmatprep.subr.mxu0 0.0
        %1594 = vmatpush2.msra.mxu0 0.0
        %1595 = vmatprep.mubr.f32.mxu0 0.0
        %1596 = vmatmul.mubr.f32.gmra.mxu0 %v1530
        %v1597 = vpop.f32.mrf.mxu0
        %v1598 = vadd.f32 %v493, %v1597
        %v1599 = vpop.f32.mrf.mxu0
        %1600 = vdwg.mxu0
        %v1601 = vmul.f32 %v1598, %v1598
        %vm1602 = vcmask 24576
        %v1603 = vsel %vm1602, %v1601, 0.0
        %1604 = vadd.xlane.f32.xlu0 %v1603
        %v1605 = vpop.xlane.xlu0 %1604
        %v1606 = vrsqrt.pop %v1605
        %v1607 = vmul.f32 %v1598, %v1606
        %v1608 = vld [vmem:[%s402] sm:$0x1]
        %1610 = vrot.lane.b32.xlu0 %v1598, 123
        %v1611 = vpop.permute.xlu0 %1610
        %v1613 = vadd.f32 %v1457, %v1611
        %1615 = vset.pattern.permute.xlu0 3
        %1616 = vperm.xlu0 %1615, %v1608
        %v1617 = vpop.permute.xlu0 %1616
        %v1619 = vlaneseq
        %v1620 = vshrl.u32 %v1619, 7
        %v1621 = vsub.s32 0, %v1620
        %v1622 = vrot.slane %v1617, %v1621
        %v1623 = vmul.f32 %v1613, %v1622
        %v1624 = vadd.f32 %v1623, %v1608
        %1626 = vrot.lane.b32.xlu0 %v1607, 3
        %v1627 = vpop.permute.xlu0 %1626
        %1629 = vrot.lane.b32.xlu0 %v1598, 3
        %v1630 = vpop.permute.xlu0 %1629
        %v1632 = vsel %vm1420, %v1624, %v1627
        %vm1633 = vcmask 56320
        %v1634 = vsel %vm1633, %v1632, %v1630
        %vm1635 = vcmask 57344
        %1636 = vst.msk [vmem:[%s378] sm:$0x1] %vm1635, %v1634
        %v1637 = vmul.f32 %v1598, %v1622
        %1639 = vrot.lane.b32.xlu0 %v1637, 123
        %v1640 = vpop.permute.xlu0 %1639
        %vm1642 = vcmask 16384
        %1643 = vst.msk [vmem:[%s391] sm:$0x1] %vm1642, %v1640
        %s1644 = sand.u32 %s184, 1
        %s1645 = scalar_lea.sflag [#allocation4], %s1644
        %s1646 = sand.u32 %s184, 1
        %s1647 = scalar_lea.vmem [#allocation7], %s1646
        %p1648 = scmp.lt.s32.totalorder %s30, 1
        %s1649 = scalar_select %p1648, %s30, 1
        %s1650 = smul.addr %s1649, 16
        %s1651 = smul.addr %s1650, 8
        %s1652 = scalar_lea.vmem %s7, %s1651
        %s1653 = sand.u32 %s236, 1
        %s1654 = scalar_lea.sflag [#allocation9], %s1653
        %s1655 = sand.u32 %s236, 1
        %s1656 = scalar_lea.vmem [#allocation8], %s1655
        // Predicated region
        $region53: #{_lambda_.1} parent=43 // pred_check
          %p1657 = pneg %p194
        $region54: #{_lambda_.1} parent=43 // pred_check_branch
          %1659 = sbr.rel (%p1657) target = $region56
        $region55: #{_lambda_.1} parent=43 // pred_region
          %s1661 = ssub.s32 16, 16
          %1662 = vsyncadd %s1645, %s1661
          %s1663 = smul.addr %s30, 16
          %s1664 = scalar_lea.hbm %s6, %s1663
          %s1666 = sshll.u32 %s1647, 4
          %s1667 = int_to_ptr.vmem [resolvable:$true] %s1666
          %1669 = dma.vmem_to_hbm [thread:$0]  %s1667, 16, %s1664, %s1645
        $region56: #{_lambda_.1} parent=43 // pred_fallthru
          _
        // Predicated region
        $region57: #{_lambda_.1} parent=43 // pred_check
          %p1670 = pneg %p220
        $region58: #{_lambda_.1} parent=43 // pred_check_branch
          %1672 = sbr.rel (%p1670) target = $region60
        $region59: #{_lambda_.1} parent=43 // pred_region
          _
        $region60: #{_lambda_.1} parent=43 // pred_fallthru
          _
        // Predicated region
        $region61: #{_lambda_.1} parent=43 // pred_check
          %p1673 = pneg %p246
        $region62: #{_lambda_.1} parent=43 // pred_check_branch
          %1675 = sbr.rel (%p1673) target = $region64
        $region63: #{_lambda_.1} parent=43 // pred_region
          %s1677 = ssub.s32 16, 16
          %1678 = vsyncadd %s1654, %s1677
          %s1679 = smul.addr %s30, 16
          %s1680 = scalar_lea.hbm %s8, %s1679
          %s1682 = sshll.u32 %s1656, 4
          %s1683 = int_to_ptr.vmem [resolvable:$true] %s1682
          %1685 = dma.vmem_to_hbm [thread:$0]  %s1683, 16, %s1680, %s1654
        $region64: #{_lambda_.1} parent=43 // pred_fallthru
          _
      $region44: #{_lambda_.1} parent=5 // pred_fallthru
        _
      %p1686 = scmp.le.s32.totalorder 2, %s25
      // Predicated region
      $region65: #{_lambda_.1} parent=5 // pred_check
        %p1687 = pneg %p1686
      $region66: #{_lambda_.1} parent=5 // pred_check_branch
        %1689 = sbr.rel (%p1687) target = $region68
      $region67: #{_lambda_.1} parent=5 // pred_region
        %s1690 = ssub.s32 %s25, 2
        // Predicated region
        $region69: #{_lambda_.1} parent=67 // pred_check
          %p1691 = pneg %p200
        $region70: #{_lambda_.1} parent=67 // pred_check_branch
          %1693 = sbr.rel (%p1691) target = $region72
        $region71: #{_lambda_.1} parent=67 // pred_region
          %s1694 = sand.u32 %s185, 1
          %s1695 = scalar_lea.sflag [#allocation4], %s1694
          %s1696 = sand.u32 %s185, 1
          %s1697 = scalar_lea.vmem [#allocation7], %s1696
          %1698 = dma.done %s1695, 16
        $region72: #{_lambda_.1} parent=67 // pred_fallthru
          _
        // Predicated region
        $region73: #{_lambda_.1} parent=67 // pred_check
          %p1699 = pneg %p226
        $region74: #{_lambda_.1} parent=67 // pred_check_branch
          %1701 = sbr.rel (%p1699) target = $region76
        $region75: #{_lambda_.1} parent=67 // pred_region
          %p1702 = scmp.lt.s32.totalorder %s31, 1
          %s1703 = scalar_select %p1702, %s31, 1
          %s1704 = smul.addr %s1703, 16
          %s1705 = smul.addr %s1704, 8
          %s1706 = scalar_lea.vmem %s7, %s1705
        $region76: #{_lambda_.1} parent=67 // pred_fallthru
          _
        // Predicated region
        $region77: #{_lambda_.1} parent=67 // pred_check
          %p1707 = pneg %p252
        $region78: #{_lambda_.1} parent=67 // pred_check_branch
          %1709 = sbr.rel (%p1707) target = $region80
        $region79: #{_lambda_.1} parent=67 // pred_region
          %s1710 = sand.u32 %s237, 1
          %s1711 = scalar_lea.sflag [#allocation9], %s1710
          %s1712 = sand.u32 %s237, 1
          %s1713 = scalar_lea.vmem [#allocation8], %s1712
          %1714 = dma.done %s1711, 16
        $region80: #{_lambda_.1} parent=67 // pred_fallthru
          _
      $region68: #{_lambda_.1} parent=5 // pred_fallthru
        _
    $region6: #{_lambda_.1} parent=1 // loop_footer
      %s29 = sadd.s32 1, %s25
    $region7: #{_lambda_.1} parent=1 // loop_footer_branch
      %24 = sbr.rel target = $region3
    $region8: #{_lambda_.1} parent=1 // loop_exit
      _
    %1715 = vsyncpa [#allocation3], 1
    %s1716 = scalar_lea.sflag [#allocation3], 1
    %1717 = vsyncpa %s1716, 1
    %1718 = vsyncpa [#allocation6], 1
    %1719 = vsyncpa [#allocation4], 1
    %s1720 = scalar_lea.sflag [#allocation4], 1
    %1721 = vsyncpa %s1720, 1
    %1722 = vsyncpa [#allocation9], 1
    %s1723 = scalar_lea.sflag [#allocation9], 1
    %1724 = vsyncpa %s1723, 1

</llo_original>
